<compile_context>
chip_gen: v5e
topology: v5e:2x2
jax: 0.10.0
libtpu: 0.0.40
codegen_flags: <defaults>
</compile_context>

<pallas_src>
import functools

import jax
import jax.numpy as jnp
import numpy as np
from jax.experimental import pallas as pl
from jax.experimental.pallas import tpu as pltpu


# ----------------------------------------------------------------------------
# Fused Pallas kernel: prefilter + band convs + pooled stats + cross-corr
# ----------------------------------------------------------------------------
def _make_fused_kernel(num_bands, cross_pairs, Bt, C, H, W):
    """Build the fused kernel for a fixed evaluator configuration.

    Kernel refs (per grid step = one (Bt, C, H, W) batch sub-block):
      w_ref     : ((1+K)*9,)        SMEM   filter taps, prefilter first (1-D, no pad blowup)
      x_ref     : (Bt, C, H, W)     VMEM   raw image sub-block
      means_ref : (Bt, K, C)        VMEM   per-channel mean per band
      vars_ref  : (Bt, K, C)        VMEM   per-channel variance per band
      xcorr_ref : (Bt, P, C, C)     VMEM   (only if cross_pairs) cross-correlations
      raw_sc    : (Bt, C, H+2, W+2) VMEM scratch, zero-padded raw image
      pre_sc    : (Bt, C, H+2, W+2) VMEM scratch, zero-padded prefiltered image
    """
    inv_hw = 1.0 / float(H * W)
    HW = H * W
    num_pairs = len(cross_pairs)

    def kernel(w_ref, x_ref, means_ref, vars_ref, *rest):
        if num_pairs:
            xcorr_ref, raw_sc, pre_sc = rest
        else:
            xcorr_ref = None
            raw_sc, pre_sc = rest

        # ---- stage 0: zero-pad the raw image inside VMEM (no host-side pad) ----
        # Full clear each step (not zero-once): safe under megacore-parallel grid
        # sharding, and only ~KB of vst traffic for <=2 grid steps.
        raw_sc[...] = jnp.zeros_like(raw_sc)
        pre_sc[...] = jnp.zeros_like(pre_sc)
        raw_sc[:, :, 1:H + 1, 1:W + 1] = x_ref[...]

        # ---- stage 1: depthwise 3x3 prefilter conv ----
        xp = raw_sc[...]
        pre = w_ref[0] * xp[:, :, 0:H, 0:W]
        for t in range(1, 9):
            dy, dx = divmod(t, 3)
            pre = pre + w_ref[t] * xp[:, :, dy:dy + H, dx:dx + W]
        # Separate scratch for the prefiltered image: stage-2 reads don't alias
        # the stage-1 source buffer, so the store doesn't serialize against it.
        pre_sc[:, :, 1:H + 1, 1:W + 1] = pre

        # ---- hoist the 9 shifted views ONCE; reused by every band conv ----
        xpp = pre_sc[...]
        shifted = []
        for t in range(9):
            dy, dx = divmod(t, 3)
            shifted.append(xpp[:, :, dy:dy + H, dx:dx + W])

        # ---- stage 2: band convs (pure FMA chains) + lane-dense mean/var ----
        bands_flat = []
        for k in range(num_bands):
            base = (k + 1) * 9
            band = w_ref[base] * shifted[0]
            for t in range(1, 9):
                band = band + w_ref[base + t] * shifted[t]
            bflat = band.reshape(Bt, C, HW)              # lane-dense (.., 256) view
            s1 = jnp.sum(bflat, axis=-1)                 # (Bt, C)
            s2 = jnp.sum(bflat * bflat, axis=-1)         # (Bt, C)
            mean = s1 * inv_hw
            # NOTE: E[x^2]-mean^2 matches the reference module's numerics (can
            # cancel for large means; a centered pass would be more robust).
            var = s2 * inv_hw - mean * mean
            means_ref[:, k, :] = mean                    # dense contiguous row
            vars_ref[:, k, :] = var
            bands_flat.append(bflat)

        # ---- stage 3: cross-channel correlation via batched MXU matmul ----
        for p, (ia, ib) in enumerate(cross_pairs):
            xc = jnp.einsum("bci,bdi->bcd", bands_flat[ia], bands_flat[ib],
                            preferred_element_type=jnp.float32) * inv_hw
            xcorr_ref[:, p, :, :] = xc                   # (Bt, C, C) dense slab

    return kernel


@functools.partial(jax.jit, static_argnames=("num_bands", "cross_pairs"))
def fused_forward(image, w_flat, num_bands, cross_pairs):
    """One fused pallas_call for the whole stacked batch.

    image  : (N, C, H, W) f32  (all images of the forward() call concatenated)
    w_flat : ((1 + num_bands) * 9,) f32 filter taps, prefilter first -> SMEM
    Returns (means (N,K,C), vars (N,K,C)[, xcorr (N,P,C,C)]).
    """
    N, C, H, W = image.shape
    num_pairs = len(cross_pairs)

    # Batch sub-block per grid step: grid=(2,) when the batch splits evenly
    # (both v7x TensorCores get work); one big step otherwise (v5e/v6e: 1 TC,
    # fewer/bigger steps minimize per-step overhead). VMEM use is KiB-scale.
    if N >= 2 and N % 2 == 0:
        Bt = N // 2
    else:
        Bt = N
    grid = (N // Bt,)

    kernel = _make_fused_kernel(num_bands, cross_pairs, Bt, C, H, W)

    out_shape = [
        jax.ShapeDtypeStruct((N, num_bands, C), jnp.float32),   # means
        jax.ShapeDtypeStruct((N, num_bands, C), jnp.float32),   # vars
    ]
    out_specs = [
        pl.BlockSpec((Bt, num_bands, C), lambda b: (b, 0, 0)),
        pl.BlockSpec((Bt, num_bands, C), lambda b: (b, 0, 0)),
    ]
    if num_pairs:
        out_shape.append(jax.ShapeDtypeStruct((N, num_pairs, C, C), jnp.float32))
        out_specs.append(pl.BlockSpec((Bt, num_pairs, C, C), lambda b: (b, 0, 0, 0)))

    return pl.pallas_call(
        kernel,
        out_shape=tuple(out_shape),
        grid=grid,
        in_specs=[
            pl.BlockSpec(memory_space=pltpu.MemorySpace.SMEM),    # 1-D tap table
            pl.BlockSpec((Bt, C, H, W), lambda b: (b, 0, 0, 0)),  # batch sub-block
        ],
        out_specs=tuple(out_specs),
        scratch_shapes=[
            pltpu.VMEM((Bt, C, H + 2, W + 2), jnp.float32),       # padded raw
            pltpu.VMEM((Bt, C, H + 2, W + 2), jnp.float32),       # padded prefiltered
        ],
        compiler_params=pltpu.CompilerParams(
            # batch axis is independent -> shards across v7x's 2 TensorCores
            dimension_semantics=("parallel",),
        ),
    )(w_flat, image)


# ----------------------------------------------------------------------------
# Synthetic sub-evaluators: they only hold weights / names; the compute is fused
# into a single pallas_call orchestrated by StatisticsEvaluator.
# ----------------------------------------------------------------------------
class Prefilter:
    """Depthwise 3x3 Gaussian prefilter (weight holder; conv runs in the fused kernel)."""

    def __init__(self, weight):
        self.weight = jnp.asarray(weight, jnp.float32)            # (3, 3)


class TemporalStatEval:
    """Depthwise 3x3 bandpass + pooled per-channel mean/var (fused)."""

    def __init__(self, name, band_weight):
        self.name = name
        self.band_weight = jnp.asarray(band_weight, jnp.float32)  # (3, 3)

    def stat_names(self, img_idx):
        return [f"{self.name}/img{img_idx}/mean", f"{self.name}/img{img_idx}/var"]

    def max_prior_frames_used(self):
        return 0


class CrossStatEval:
    """C x C cross-channel correlation between two temporal evals' pyramids (fused)."""

    def __init__(self, name_a, name_b):
        self.name_a, self.name_b = name_a, name_b

    def stat_names(self, img_idx):
        return [f"xcorr({self.name_a},{self.name_b})/img{img_idx}"]


class StatisticsEvaluator:
    """JAX/Pallas mirror of StatisticsEvaluator.forward with a fused kernel backend.

    The band "pyramids" (spyr_dict in the PyTorch module) are consumed only by the
    cross evaluators, so they are kept in VMEM inside the fused kernel and never
    materialized in HBM; forward() still returns the same stats_list.
    """

    def __init__(self, temporal_evals, cross_evals=(), prefilter=None):
        self.prefilter = prefilter
        self.temporal_evals = list(temporal_evals)
        self.cross_evals = list(cross_evals)
        self.statlabels = None

        # Static fusion plan: resolve cross-eval names to temporal-eval indices and
        # flatten all 3x3 taps (prefilter first) into one 1-D SMEM-resident array.
        names = [t.name for t in self.temporal_evals]
        self._cross_pairs = tuple(
            (names.index(x.name_a), names.index(x.name_b)) for x in self.cross_evals
        )
        if prefilter is not None:
            w_pre = prefilter.weight
        else:
            w_pre = jnp.zeros((3, 3), jnp.float32).at[1, 1].set(1.0)  # identity tap
        taps = [w_pre.reshape(9)] + [t.band_weight.reshape(9) for t in self.temporal_evals]
        self._w_flat = jnp.concatenate(taps, axis=0)               # ((1+K)*9,)

    def __call__(self, images, *, create_labels=False, statlabel_callback=None):
        # TODO(synk): statlabel_callback is host-side label plumbing in the original
        # module's sub-evaluators; labels are produced directly here instead.
        if isinstance(images, jnp.ndarray):                        # torch.is_tensor analog
            images = (images,)
        images = tuple(images)
        K = len(self.temporal_evals)
        n_img = len(images)

        same_shape = all(img.shape == images[0].shape for img in images)
        if same_shape:
            # One pallas_call for ALL images: stack along batch, slice afterwards.
            B = images[0].shape[0]
            stacked = images[0] if n_img == 1 else jnp.concatenate(images, axis=0)
            outs = fused_forward(stacked, self._w_flat, num_bands=K,
                                 cross_pairs=self._cross_pairs)
            per_image = [tuple(o[idx * B:(idx + 1) * B] for o in outs)
                         for idx in range(n_img)]
        else:
            # TODO(synk): heterogeneous image shapes fall back to one call per image.
            per_image = [fused_forward(img, self._w_flat, num_bands=K,
                                       cross_pairs=self._cross_pairs)
                         for img in images]

        stats_list = []
        stat_labels = [] if create_labels else None

        # Temporal stats (same ordering as the module: per eval, per image, mean then var).
        for k, teval in enumerate(self.temporal_evals):
            for idx, outs_i in enumerate(per_image):
                means, variances = outs_i[0], outs_i[1]            # (B, K, C)
                stats_list.append(means[:, k, :])                  # (B, C)
                stats_list.append(variances[:, k, :])              # (B, C)
                if stat_labels is not None:
                    stat_labels.extend(teval.stat_names(idx))

        # Cross stats (per cross eval, per image).
        for p, xeval in enumerate(self.cross_evals):
            for idx, outs_i in enumerate(per_image):
                stats_list.append(outs_i[2][:, p])                 # (B, C, C)
                if stat_labels is not None:
                    stat_labels.extend(xeval.stat_names(idx))

        if stat_labels is not None:
            self.statlabels = stat_labels
        return stats_list

    def max_prior_frames_used(self):
        return max(t.max_prior_frames_used() for t in self.temporal_evals)

    def get_label(self, statindex):
        return self.statlabels[statindex]

    def get_all_labels(self):
        return self.statlabels

    # TODO(synk): make_pyramids / blame_stats raise NotImplementedError upstream;
    # the stat-config machinery (set_stat, set_mode, ...) is host-side bookkeeping
    # with no kernel work, so it is not reproduced here.


# ----------------------------------------------------------------------------
# Pure-JAX reference for verification
# ----------------------------------------------------------------------------
def _ref_conv3x3(x, w):
    B, C, H, W = x.shape
    xp = jnp.pad(x, ((0, 0), (0, 0), (1, 1), (1, 1)))
    out = jnp.zeros_like(x)
    for dy in range(3):
        for dx in range(3):
            out = out + w[dy, dx] * xp[:, :, dy:dy + H, dx:dx + W]
    return out


def _ref_forward(images, wpre, wa, wb):
    x = _ref_conv3x3(images, wpre)
    out = []
    bands = []
    for wband in (wa, wb):
        band = _ref_conv3x3(x, wband)
        bands.append(band)
        flat = band.reshape(band.shape[0], band.shape[1], -1)
        mean = flat.mean(-1)
        var = (flat * flat).mean(-1) - mean * mean
        out.extend([mean, var])
    B, C, H, W = bands[0].shape
    fa = bands[0].reshape(B, C, H * W)
    fb = bands[1].reshape(B, C, H * W)
    out.append(jnp.einsum("bci,bdi->bcd", fa, fb) / (H * W))
    return out


# ----------------------------------------------------------------------------
if __name__ == "__main__":
    key = jax.random.PRNGKey(0)
    B, C, H, W = 2, 4, 16, 16
    images = jax.random.normal(key, (B, C, H, W), dtype=jnp.float32)

    # Deterministic "parameters" (the module's __init__ only stores sub-evaluators).
    w_prefilter = jnp.asarray([[1., 2., 1.], [2., 4., 2.], [1., 2., 1.]],
                              dtype=jnp.float32) / 16.0                     # Gaussian blur
    w_band_a = jnp.asarray([[0., -1., 0.], [-1., 4., -1.], [0., -1., 0.]],
                           dtype=jnp.float32)                               # Laplacian-like
    w_band_b = jnp.asarray([[-1., 0., 1.], [-2., 0., 2.], [-1., 0., 1.]],
                           dtype=jnp.float32)                               # Sobel-x-like

    evaluator = StatisticsEvaluator(
        temporal_evals=[TemporalStatEval("bandA", w_band_a),
                        TemporalStatEval("bandB", w_band_b)],
        cross_evals=[CrossStatEval("bandA", "bandB")],
        prefilter=Prefilter(w_prefilter),
    )

    stats_list = evaluator(images, create_labels=True)
    stats_list = [jax.block_until_ready(s) for s in stats_list]

    # Verify against a pure-JAX reference.
    ref = _ref_forward(images, w_prefilter, w_band_a, w_band_b)
    assert len(stats_list) == len(ref)
    for got, want in zip(stats_list, ref):
        np.testing.assert_allclose(np.asarray(got), np.asarray(want),
                                   rtol=1e-4, atol=1e-4)

    print("KERNEL_OK")
</pallas_src>

<mosaic_0001>
module attributes {stable_mosaic.version = 11 : i64} {
  func.func @kernel(%arg0: i32, %arg1: memref<27xf32, #tpu.memory_space<smem>>, %arg2: memref<1x4x16x16xf32, #tpu.memory_space<vmem>>, %arg3: memref<1x2x4xf32, #tpu.memory_space<vmem>>, %arg4: memref<1x2x4xf32, #tpu.memory_space<vmem>>, %arg5: memref<1x1x4x4xf32, #tpu.memory_space<vmem>>, %arg6: memref<1x4x18x18xf32, #tpu.memory_space<vmem>>, %arg7: memref<1x4x18x18xf32, #tpu.memory_space<vmem>>) attributes {dimension_semantics = [#tpu.dimension_semantics<parallel>], iteration_bounds = array<i64: 2>, scalar_prefetch = 0 : i64, scratch_operands = 2 : i64, tpu.core_type = #tpu.core_type<tc>, window_params = [{transform_indices = @transform_0, window_bounds = array<i64: 27>}, {transform_indices = @transform_1, window_bounds = array<i64: 1, 4, 16, 16>}, {transform_indices = @transform_2, window_bounds = array<i64: 1, 2, 4>}, {transform_indices = @transform_3, window_bounds = array<i64: 1, 2, 4>}, {transform_indices = @transform_4, window_bounds = array<i64: 1, 1, 4, 4>}]} {
    %cst = arith.constant 0.000000e+00 : f32
    %0 = vector.broadcast %cst : f32 to vector<1x4x18x18xf32>
    %c0 = arith.constant 0 : index
    %c0_0 = arith.constant 0 : index
    %c0_1 = arith.constant 0 : index
    %c0_2 = arith.constant 0 : index
    %1 = vector.load %arg6[%c0, %c0_0, %c0_1, %c0_2] : memref<1x4x18x18xf32, #tpu.memory_space<vmem>>, vector<1x4x18x18xf32>
    tpu.vector_store %arg6[%c0, %c0_0, %c0_1, %c0_2], %0 {strides = array<i32>} : memref<1x4x18x18xf32, #tpu.memory_space<vmem>>, vector<1x4x18x18xf32>,
    %cst_3 = arith.constant 0.000000e+00 : f32
    %2 = vector.broadcast %cst_3 : f32 to vector<1x4x18x18xf32>
    %c0_4 = arith.constant 0 : index
    %c0_5 = arith.constant 0 : index
    %c0_6 = arith.constant 0 : index
    %c0_7 = arith.constant 0 : index
    %3 = vector.load %arg7[%c0_4, %c0_5, %c0_6, %c0_7] : memref<1x4x18x18xf32, #tpu.memory_space<vmem>>, vector<1x4x18x18xf32>
    tpu.vector_store %arg7[%c0_4, %c0_5, %c0_6, %c0_7], %2 {strides = array<i32>} : memref<1x4x18x18xf32, #tpu.memory_space<vmem>>, vector<1x4x18x18xf32>,
    %c0_8 = arith.constant 0 : index
    %c0_9 = arith.constant 0 : index
    %c0_10 = arith.constant 0 : index
    %c0_11 = arith.constant 0 : index
    %4 = vector.load %arg2[%c0_8, %c0_9, %c0_10, %c0_11] : memref<1x4x16x16xf32, #tpu.memory_space<vmem>>, vector<1x4x16x16xf32>
    %c0_12 = arith.constant 0 : index
    %c0_13 = arith.constant 0 : index
    %c1 = arith.constant 1 : index
    %c1_14 = arith.constant 1 : index
    %5 = vector.load %arg6[%c0_12, %c0_13, %c1, %c1_14] : memref<1x4x18x18xf32, #tpu.memory_space<vmem>>, vector<1x4x16x16xf32>
    tpu.vector_store %arg6[%c0_12, %c0_13, %c1, %c1_14], %4 {strides = array<i32>} : memref<1x4x18x18xf32, #tpu.memory_space<vmem>>, vector<1x4x16x16xf32>,
    %c0_15 = arith.constant 0 : index
    %c0_16 = arith.constant 0 : index
    %c0_17 = arith.constant 0 : index
    %c0_18 = arith.constant 0 : index
    %6 = vector.load %arg6[%c0_15, %c0_16, %c0_17, %c0_18] : memref<1x4x18x18xf32, #tpu.memory_space<vmem>>, vector<1x4x18x18xf32>
    %c0_19 = arith.constant 0 : index
    %7 = memref.load %arg1[%c0_19] : memref<27xf32, #tpu.memory_space<smem>>
    %8 = vector.extract_strided_slice %6 {offsets = [0, 0, 0, 0], sizes = [1, 4, 16, 16], strides = [1, 1, 1, 1]} : vector<1x4x18x18xf32> to vector<1x4x16x16xf32>
    %9 = vector.broadcast %7 : f32 to vector<1x4x16x16xf32>
    %10 = arith.mulf %9, %8 : vector<1x4x16x16xf32>
    %c1_20 = arith.constant 1 : index
    %11 = memref.load %arg1[%c1_20] : memref<27xf32, #tpu.memory_space<smem>>
    %12 = vector.extract_strided_slice %6 {offsets = [0, 0, 0, 1], sizes = [1, 4, 16, 16], strides = [1, 1, 1, 1]} : vector<1x4x18x18xf32> to vector<1x4x16x16xf32>
    %13 = vector.broadcast %11 : f32 to vector<1x4x16x16xf32>
    %14 = arith.mulf %13, %12 : vector<1x4x16x16xf32>
    %15 = arith.addf %10, %14 : vector<1x4x16x16xf32>
    %c2 = arith.constant 2 : index
    %16 = memref.load %arg1[%c2] : memref<27xf32, #tpu.memory_space<smem>>
    %17 = vector.extract_strided_slice %6 {offsets = [0, 0, 0, 2], sizes = [1, 4, 16, 16], strides = [1, 1, 1, 1]} : vector<1x4x18x18xf32> to vector<1x4x16x16xf32>
    %18 = vector.broadcast %16 : f32 to vector<1x4x16x16xf32>
    %19 = arith.mulf %18, %17 : vector<1x4x16x16xf32>
    %20 = arith.addf %15, %19 : vector<1x4x16x16xf32>
    %c3 = arith.constant 3 : index
    %21 = memref.load %arg1[%c3] : memref<27xf32, #tpu.memory_space<smem>>
    %22 = vector.extract_strided_slice %6 {offsets = [0, 0, 1, 0], sizes = [1, 4, 16, 16], strides = [1, 1, 1, 1]} : vector<1x4x18x18xf32> to vector<1x4x16x16xf32>
    %23 = vector.broadcast %21 : f32 to vector<1x4x16x16xf32>
    %24 = arith.mulf %23, %22 : vector<1x4x16x16xf32>
    %25 = arith.addf %20, %24 : vector<1x4x16x16xf32>
    %c4 = arith.constant 4 : index
    %26 = memref.load %arg1[%c4] : memref<27xf32, #tpu.memory_space<smem>>
    %27 = vector.extract_strided_slice %6 {offsets = [0, 0, 1, 1], sizes = [1, 4, 16, 16], strides = [1, 1, 1, 1]} : vector<1x4x18x18xf32> to vector<1x4x16x16xf32>
    %28 = vector.broadcast %26 : f32 to vector<1x4x16x16xf32>
    %29 = arith.mulf %28, %27 : vector<1x4x16x16xf32>
    %30 = arith.addf %25, %29 : vector<1x4x16x16xf32>
    %c5 = arith.constant 5 : index
    %31 = memref.load %arg1[%c5] : memref<27xf32, #tpu.memory_space<smem>>
    %32 = vector.extract_strided_slice %6 {offsets = [0, 0, 1, 2], sizes = [1, 4, 16, 16], strides = [1, 1, 1, 1]} : vector<1x4x18x18xf32> to vector<1x4x16x16xf32>
    %33 = vector.broadcast %31 : f32 to vector<1x4x16x16xf32>
    %34 = arith.mulf %33, %32 : vector<1x4x16x16xf32>
    %35 = arith.addf %30, %34 : vector<1x4x16x16xf32>
    %c6 = arith.constant 6 : index
    %36 = memref.load %arg1[%c6] : memref<27xf32, #tpu.memory_space<smem>>
    %37 = vector.extract_strided_slice %6 {offsets = [0, 0, 2, 0], sizes = [1, 4, 16, 16], strides = [1, 1, 1, 1]} : vector<1x4x18x18xf32> to vector<1x4x16x16xf32>
    %38 = vector.broadcast %36 : f32 to vector<1x4x16x16xf32>
    %39 = arith.mulf %38, %37 : vector<1x4x16x16xf32>
    %40 = arith.addf %35, %39 : vector<1x4x16x16xf32>
    %c7 = arith.constant 7 : index
    %41 = memref.load %arg1[%c7] : memref<27xf32, #tpu.memory_space<smem>>
    %42 = vector.extract_strided_slice %6 {offsets = [0, 0, 2, 1], sizes = [1, 4, 16, 16], strides = [1, 1, 1, 1]} : vector<1x4x18x18xf32> to vector<1x4x16x16xf32>
    %43 = vector.broadcast %41 : f32 to vector<1x4x16x16xf32>
    %44 = arith.mulf %43, %42 : vector<1x4x16x16xf32>
    %45 = arith.addf %40, %44 : vector<1x4x16x16xf32>
    %c8 = arith.constant 8 : index
    %46 = memref.load %arg1[%c8] : memref<27xf32, #tpu.memory_space<smem>>
    %47 = vector.extract_strided_slice %6 {offsets = [0, 0, 2, 2], sizes = [1, 4, 16, 16], strides = [1, 1, 1, 1]} : vector<1x4x18x18xf32> to vector<1x4x16x16xf32>
    %48 = vector.broadcast %46 : f32 to vector<1x4x16x16xf32>
    %49 = arith.mulf %48, %47 : vector<1x4x16x16xf32>
    %50 = arith.addf %45, %49 : vector<1x4x16x16xf32>
    %c0_21 = arith.constant 0 : index
    %c0_22 = arith.constant 0 : index
    %c1_23 = arith.constant 1 : index
    %c1_24 = arith.constant 1 : index
    %51 = vector.load %arg7[%c0_21, %c0_22, %c1_23, %c1_24] : memref<1x4x18x18xf32, #tpu.memory_space<vmem>>, vector<1x4x16x16xf32>
    tpu.vector_store %arg7[%c0_21, %c0_22, %c1_23, %c1_24], %50 {strides = array<i32>} : memref<1x4x18x18xf32, #tpu.memory_space<vmem>>, vector<1x4x16x16xf32>,
    %c0_25 = arith.constant 0 : index
    %c0_26 = arith.constant 0 : index
    %c0_27 = arith.constant 0 : index
    %c0_28 = arith.constant 0 : index
    %52 = vector.load %arg7[%c0_25, %c0_26, %c0_27, %c0_28] : memref<1x4x18x18xf32, #tpu.memory_space<vmem>>, vector<1x4x18x18xf32>
    %53 = vector.extract_strided_slice %52 {offsets = [0, 0, 0, 0], sizes = [1, 4, 16, 16], strides = [1, 1, 1, 1]} : vector<1x4x18x18xf32> to vector<1x4x16x16xf32>
    %54 = vector.extract_strided_slice %52 {offsets = [0, 0, 0, 1], sizes = [1, 4, 16, 16], strides = [1, 1, 1, 1]} : vector<1x4x18x18xf32> to vector<1x4x16x16xf32>
    %55 = vector.extract_strided_slice %52 {offsets = [0, 0, 0, 2], sizes = [1, 4, 16, 16], strides = [1, 1, 1, 1]} : vector<1x4x18x18xf32> to vector<1x4x16x16xf32>
    %56 = vector.extract_strided_slice %52 {offsets = [0, 0, 1, 0], sizes = [1, 4, 16, 16], strides = [1, 1, 1, 1]} : vector<1x4x18x18xf32> to vector<1x4x16x16xf32>
    %57 = vector.extract_strided_slice %52 {offsets = [0, 0, 1, 1], sizes = [1, 4, 16, 16], strides = [1, 1, 1, 1]} : vector<1x4x18x18xf32> to vector<1x4x16x16xf32>
    %58 = vector.extract_strided_slice %52 {offsets = [0, 0, 1, 2], sizes = [1, 4, 16, 16], strides = [1, 1, 1, 1]} : vector<1x4x18x18xf32> to vector<1x4x16x16xf32>
    %59 = vector.extract_strided_slice %52 {offsets = [0, 0, 2, 0], sizes = [1, 4, 16, 16], strides = [1, 1, 1, 1]} : vector<1x4x18x18xf32> to vector<1x4x16x16xf32>
    %60 = vector.extract_strided_slice %52 {offsets = [0, 0, 2, 1], sizes = [1, 4, 16, 16], strides = [1, 1, 1, 1]} : vector<1x4x18x18xf32> to vector<1x4x16x16xf32>
    %61 = vector.extract_strided_slice %52 {offsets = [0, 0, 2, 2], sizes = [1, 4, 16, 16], strides = [1, 1, 1, 1]} : vector<1x4x18x18xf32> to vector<1x4x16x16xf32>
    %c9 = arith.constant 9 : index
    %62 = memref.load %arg1[%c9] : memref<27xf32, #tpu.memory_space<smem>>
    %63 = vector.broadcast %62 : f32 to vector<1x4x16x16xf32>
    %64 = arith.mulf %63, %53 : vector<1x4x16x16xf32>
    %c10 = arith.constant 10 : index
    %65 = memref.load %arg1[%c10] : memref<27xf32, #tpu.memory_space<smem>>
    %66 = vector.broadcast %65 : f32 to vector<1x4x16x16xf32>
    %67 = arith.mulf %66, %54 : vector<1x4x16x16xf32>
    %68 = arith.addf %64, %67 : vector<1x4x16x16xf32>
    %c11 = arith.constant 11 : index
    %69 = memref.load %arg1[%c11] : memref<27xf32, #tpu.memory_space<smem>>
    %70 = vector.broadcast %69 : f32 to vector<1x4x16x16xf32>
    %71 = arith.mulf %70, %55 : vector<1x4x16x16xf32>
    %72 = arith.addf %68, %71 : vector<1x4x16x16xf32>
    %c12 = arith.constant 12 : index
    %73 = memref.load %arg1[%c12] : memref<27xf32, #tpu.memory_space<smem>>
    %74 = vector.broadcast %73 : f32 to vector<1x4x16x16xf32>
    %75 = arith.mulf %74, %56 : vector<1x4x16x16xf32>
    %76 = arith.addf %72, %75 : vector<1x4x16x16xf32>
    %c13 = arith.constant 13 : index
    %77 = memref.load %arg1[%c13] : memref<27xf32, #tpu.memory_space<smem>>
    %78 = vector.broadcast %77 : f32 to vector<1x4x16x16xf32>
    %79 = arith.mulf %78, %57 : vector<1x4x16x16xf32>
    %80 = arith.addf %76, %79 : vector<1x4x16x16xf32>
    %c14 = arith.constant 14 : index
    %81 = memref.load %arg1[%c14] : memref<27xf32, #tpu.memory_space<smem>>
    %82 = vector.broadcast %81 : f32 to vector<1x4x16x16xf32>
    %83 = arith.mulf %82, %58 : vector<1x4x16x16xf32>
    %84 = arith.addf %80, %83 : vector<1x4x16x16xf32>
    %c15 = arith.constant 15 : index
    %85 = memref.load %arg1[%c15] : memref<27xf32, #tpu.memory_space<smem>>
    %86 = vector.broadcast %85 : f32 to vector<1x4x16x16xf32>
    %87 = arith.mulf %86, %59 : vector<1x4x16x16xf32>
    %88 = arith.addf %84, %87 : vector<1x4x16x16xf32>
    %c16 = arith.constant 16 : index
    %89 = memref.load %arg1[%c16] : memref<27xf32, #tpu.memory_space<smem>>
    %90 = vector.broadcast %89 : f32 to vector<1x4x16x16xf32>
    %91 = arith.mulf %90, %60 : vector<1x4x16x16xf32>
    %92 = arith.addf %88, %91 : vector<1x4x16x16xf32>
    %c17 = arith.constant 17 : index
    %93 = memref.load %arg1[%c17] : memref<27xf32, #tpu.memory_space<smem>>
    %94 = vector.broadcast %93 : f32 to vector<1x4x16x16xf32>
    %95 = arith.mulf %94, %61 : vector<1x4x16x16xf32>
    %96 = arith.addf %92, %95 : vector<1x4x16x16xf32>
    %97 = vector.shape_cast %96 : vector<1x4x16x16xf32> to vector<1x4x256xf32>
    %cst_29 = arith.constant dense<0.000000e+00> : vector<1x4xf32>
    %98 = vector.multi_reduction <add>, %97, %cst_29 [2] : vector<1x4x256xf32> to vector<1x4xf32>
    %99 = arith.mulf %97, %97 : vector<1x4x256xf32>
    %cst_30 = arith.constant dense<0.000000e+00> : vector<1x4xf32>
    %100 = vector.multi_reduction <add>, %99, %cst_30 [2] : vector<1x4x256xf32> to vector<1x4xf32>
    %cst_31 = arith.constant 3.906250e-03 : f32
    %101 = vector.broadcast %cst_31 : f32 to vector<1x4xf32>
    %102 = arith.mulf %98, %101 : vector<1x4xf32>
    %cst_32 = arith.constant 3.906250e-03 : f32
    %103 = vector.broadcast %cst_32 : f32 to vector<1x4xf32>
    %104 = arith.mulf %100, %103 : vector<1x4xf32>
    %105 = arith.mulf %102, %102 : vector<1x4xf32>
    %106 = arith.subf %104, %105 : vector<1x4xf32>
    %c0_33 = arith.constant 0 : index
    %c0_34 = arith.constant 0 : index
    %c0_35 = arith.constant 0 : index
    %107 = vector.load %arg3[%c0_33, %c0_34, %c0_35] : memref<1x2x4xf32, #tpu.memory_space<vmem>>, vector<1x1x4xf32>
    %108 = vector.shape_cast %107 : vector<1x1x4xf32> to vector<1x4xf32>
    %109 = vector.shape_cast %102 : vector<1x4xf32> to vector<1x1x4xf32>
    tpu.vector_store %arg3[%c0_33, %c0_34, %c0_35], %109 {strides = array<i32>} : memref<1x2x4xf32, #tpu.memory_space<vmem>>, vector<1x1x4xf32>,
    %c0_36 = arith.constant 0 : index
    %c0_37 = arith.constant 0 : index
    %c0_38 = arith.constant 0 : index
    %110 = vector.load %arg4[%c0_36, %c0_37, %c0_38] : memref<1x2x4xf32, #tpu.memory_space<vmem>>, vector<1x1x4xf32>
    %111 = vector.shape_cast %110 : vector<1x1x4xf32> to vector<1x4xf32>
    %112 = vector.shape_cast %106 : vector<1x4xf32> to vector<1x1x4xf32>
    tpu.vector_store %arg4[%c0_36, %c0_37, %c0_38], %112 {strides = array<i32>} : memref<1x2x4xf32, #tpu.memory_space<vmem>>, vector<1x1x4xf32>,
    %c18 = arith.constant 18 : index
    %113 = memref.load %arg1[%c18] : memref<27xf32, #tpu.memory_space<smem>>
    %114 = vector.broadcast %113 : f32 to vector<1x4x16x16xf32>
    %115 = arith.mulf %114, %53 : vector<1x4x16x16xf32>
    %c19 = arith.constant 19 : index
    %116 = memref.load %arg1[%c19] : memref<27xf32, #tpu.memory_space<smem>>
    %117 = vector.broadcast %116 : f32 to vector<1x4x16x16xf32>
    %118 = arith.mulf %117, %54 : vector<1x4x16x16xf32>
    %119 = arith.addf %115, %118 : vector<1x4x16x16xf32>
    %c20 = arith.constant 20 : index
    %120 = memref.load %arg1[%c20] : memref<27xf32, #tpu.memory_space<smem>>
    %121 = vector.broadcast %120 : f32 to vector<1x4x16x16xf32>
    %122 = arith.mulf %121, %55 : vector<1x4x16x16xf32>
    %123 = arith.addf %119, %122 : vector<1x4x16x16xf32>
    %c21 = arith.constant 21 : index
    %124 = memref.load %arg1[%c21] : memref<27xf32, #tpu.memory_space<smem>>
    %125 = vector.broadcast %124 : f32 to vector<1x4x16x16xf32>
    %126 = arith.mulf %125, %56 : vector<1x4x16x16xf32>
    %127 = arith.addf %123, %126 : vector<1x4x16x16xf32>
    %c22 = arith.constant 22 : index
    %128 = memref.load %arg1[%c22] : memref<27xf32, #tpu.memory_space<smem>>
    %129 = vector.broadcast %128 : f32 to vector<1x4x16x16xf32>
    %130 = arith.mulf %129, %57 : vector<1x4x16x16xf32>
    %131 = arith.addf %127, %130 : vector<1x4x16x16xf32>
    %c23 = arith.constant 23 : index
    %132 = memref.load %arg1[%c23] : memref<27xf32, #tpu.memory_space<smem>>
    %133 = vector.broadcast %132 : f32 to vector<1x4x16x16xf32>
    %134 = arith.mulf %133, %58 : vector<1x4x16x16xf32>
    %135 = arith.addf %131, %134 : vector<1x4x16x16xf32>
    %c24 = arith.constant 24 : index
    %136 = memref.load %arg1[%c24] : memref<27xf32, #tpu.memory_space<smem>>
    %137 = vector.broadcast %136 : f32 to vector<1x4x16x16xf32>
    %138 = arith.mulf %137, %59 : vector<1x4x16x16xf32>
    %139 = arith.addf %135, %138 : vector<1x4x16x16xf32>
    %c25 = arith.constant 25 : index
    %140 = memref.load %arg1[%c25] : memref<27xf32, #tpu.memory_space<smem>>
    %141 = vector.broadcast %140 : f32 to vector<1x4x16x16xf32>
    %142 = arith.mulf %141, %60 : vector<1x4x16x16xf32>
    %143 = arith.addf %139, %142 : vector<1x4x16x16xf32>
    %c26 = arith.constant 26 : index
    %144 = memref.load %arg1[%c26] : memref<27xf32, #tpu.memory_space<smem>>
    %145 = vector.broadcast %144 : f32 to vector<1x4x16x16xf32>
    %146 = arith.mulf %145, %61 : vector<1x4x16x16xf32>
    %147 = arith.addf %143, %146 : vector<1x4x16x16xf32>
    %148 = vector.shape_cast %147 : vector<1x4x16x16xf32> to vector<1x4x256xf32>
    %cst_39 = arith.constant dense<0.000000e+00> : vector<1x4xf32>
    %149 = vector.multi_reduction <add>, %148, %cst_39 [2] : vector<1x4x256xf32> to vector<1x4xf32>
    %150 = arith.mulf %148, %148 : vector<1x4x256xf32>
    %cst_40 = arith.constant dense<0.000000e+00> : vector<1x4xf32>
    %151 = vector.multi_reduction <add>, %150, %cst_40 [2] : vector<1x4x256xf32> to vector<1x4xf32>
    %cst_41 = arith.constant 3.906250e-03 : f32
    %152 = vector.broadcast %cst_41 : f32 to vector<1x4xf32>
    %153 = arith.mulf %149, %152 : vector<1x4xf32>
    %cst_42 = arith.constant 3.906250e-03 : f32
    %154 = vector.broadcast %cst_42 : f32 to vector<1x4xf32>
    %155 = arith.mulf %151, %154 : vector<1x4xf32>
    %156 = arith.mulf %153, %153 : vector<1x4xf32>
    %157 = arith.subf %155, %156 : vector<1x4xf32>
    %c0_43 = arith.constant 0 : index
    %c1_44 = arith.constant 1 : index
    %c0_45 = arith.constant 0 : index
    %158 = vector.load %arg3[%c0_43, %c1_44, %c0_45] : memref<1x2x4xf32, #tpu.memory_space<vmem>>, vector<1x1x4xf32>
    %159 = vector.shape_cast %158 : vector<1x1x4xf32> to vector<1x4xf32>
    %160 = vector.shape_cast %153 : vector<1x4xf32> to vector<1x1x4xf32>
    tpu.vector_store %arg3[%c0_43, %c1_44, %c0_45], %160 {strides = array<i32>} : memref<1x2x4xf32, #tpu.memory_space<vmem>>, vector<1x1x4xf32>,
    %c0_46 = arith.constant 0 : index
    %c1_47 = arith.constant 1 : index
    %c0_48 = arith.constant 0 : index
    %161 = vector.load %arg4[%c0_46, %c1_47, %c0_48] : memref<1x2x4xf32, #tpu.memory_space<vmem>>, vector<1x1x4xf32>
    %162 = vector.shape_cast %161 : vector<1x1x4xf32> to vector<1x4xf32>
    %163 = vector.shape_cast %157 : vector<1x4xf32> to vector<1x1x4xf32>
    tpu.vector_store %arg4[%c0_46, %c1_47, %c0_48], %163 {strides = array<i32>} : memref<1x2x4xf32, #tpu.memory_space<vmem>>, vector<1x1x4xf32>,
    "tpu.trace_start"() <{level = 10 : i32, message = "bci,bdi->bcd"}> : () -> ()
    %cst_49 = arith.constant dense<0.000000e+00> : vector<1x4x4xf32>
    %164 = tpu.matmul %97, %148, %cst_49 {dimension_numbers = #tpu.dot_dimension_numbers<[2], [2], [1], [1], [0, 0, 0, 1, 1, 1], [0], [0]>} : vector<1x4x256xf32>, vector<1x4x256xf32>, vector<1x4x4xf32> -> vector<1x4x4xf32>
    "tpu.trace_stop"() : () -> ()
    %cst_50 = arith.constant 3.906250e-03 : f32
    %165 = vector.broadcast %cst_50 : f32 to vector<1x4x4xf32>
    %166 = arith.mulf %164, %165 : vector<1x4x4xf32>
    %c0_51 = arith.constant 0 : index
    %c0_52 = arith.constant 0 : index
    %c0_53 = arith.constant 0 : index
    %c0_54 = arith.constant 0 : index
    %167 = vector.load %arg5[%c0_51, %c0_52, %c0_53, %c0_54] : memref<1x1x4x4xf32, #tpu.memory_space<vmem>>, vector<1x1x4x4xf32>
    %168 = vector.shape_cast %167 : vector<1x1x4x4xf32> to vector<1x4x4xf32>
    %169 = vector.shape_cast %166 : vector<1x4x4xf32> to vector<1x1x4x4xf32>
    tpu.vector_store %arg5[%c0_51, %c0_52, %c0_53, %c0_54], %169 {strides = array<i32>} : memref<1x1x4x4xf32, #tpu.memory_space<vmem>>, vector<1x1x4x4xf32>,
    return
  }
  func.func @transform_0(%arg0: i32) -> i32 {
    %c0_i32 = arith.constant 0 : i32
    %c0_i32_0 = arith.constant 0 : i32
    return %c0_i32 : i32
  }
  func.func @transform_1(%arg0: i32) -> (i32, i32, i32, i32) {
    %c0_i32 = arith.constant 0 : i32
    %c0_i32_0 = arith.constant 0 : i32
    %c0_i32_1 = arith.constant 0 : i32
    %c0_i32_2 = arith.constant 0 : i32
    return %arg0, %c0_i32, %c0_i32_0, %c0_i32_1 : i32, i32, i32, i32
  }
  func.func @transform_2(%arg0: i32) -> (i32, i32, i32) {
    %c0_i32 = arith.constant 0 : i32
    %c0_i32_0 = arith.constant 0 : i32
    %c0_i32_1 = arith.constant 0 : i32
    return %arg0, %c0_i32, %c0_i32_0 : i32, i32, i32
  }
  func.func @transform_3(%arg0: i32) -> (i32, i32, i32) {
    %c0_i32 = arith.constant 0 : i32
    %c0_i32_0 = arith.constant 0 : i32
    %c0_i32_1 = arith.constant 0 : i32
    return %arg0, %c0_i32, %c0_i32_0 : i32, i32, i32
  }
  func.func @transform_4(%arg0: i32) -> (i32, i32, i32, i32) {
    %c0_i32 = arith.constant 0 : i32
    %c0_i32_0 = arith.constant 0 : i32
    %c0_i32_1 = arith.constant 0 : i32
    %c0_i32_2 = arith.constant 0 : i32
    return %arg0, %c0_i32, %c0_i32_0, %c0_i32_1 : i32, i32, i32, i32
  }
}

</mosaic_0001>

<llo_original>
// kernel: fused_forward.1
$region0: #{fused_forward.1}
  #allocation0 [shape = 'u32[]', space=smem, size = 0x4, offset = 0x4, fixed_abs, tag = 'smem constant byte address 0x4 - core index']
  #allocation1 [shape = 'u32[72,128]{1,0:T(1,128)}', space=vmem, size = 0x9000, scoped, tag = 'internal scratch']
  #allocation2 [shape = 'f32[1,4,18,18]{3,2,1,0:T(8,128)}', space=vmem, size = 0xc000, scoped, tag = 'scratch operand']
  #allocation3 [shape = 'f32[1,4,18,18]{3,2,1,0:T(8,128)}', space=vmem, size = 0xc000, scoped, tag = 'scratch operand']
  %s0 = inlined_call_operand.hbm [shape: f32[27], index: 0, kind: input, shape index: {}]
  %s1 = inlined_call_operand.hbm [shape: f32[2,4,16,16], index: 1, kind: input, shape index: {}]
  %s2 = inlined_call_operand.hbm [shape: f32[2,2,4], index: 2, kind: output, shape index: {0}]
  %s3 = inlined_call_operand.hbm [shape: f32[2,2,4], index: 3, kind: output, shape index: {1}]
  %s4 = inlined_call_operand.hbm [shape: f32[2,1,4,4], index: 4, kind: output, shape index: {2}]
  %5 = xla_tuple %s2, %s3, %s4
  %s6 = sld [smem:[#allocation0]]
  $region65: #{fused_forward.1} parent=0
    _
  %s8 = ssub.s32 1, %s6
  %s9 = scalar_select 0, %s8, %s6
  $region1: #{fused_forward.1} parent=0
    #allocation4 [shape = 'u8[512]{0}', space=smem, size = 0x200, scoped, tag = 'input window, operand 0, single buffered']
    #allocation5 [shape = 's32[2]{0}', space=sflag, size = 0x8, scoped, tag = 'scoped memory for fused_forward.1']
    #allocation6 [shape = 's32[2]{0}', space=sflag, size = 0x8, scoped, tag = 'scoped memory for fused_forward.1']
    #allocation7 [shape = 's32[2]{0}', space=sflag, size = 0x8, scoped, tag = 'scoped memory for fused_forward.1']
    #allocation8 [shape = 'u8[65536]{0}', space=vmem, size = 0x10000, scoped, tag = 'input window, operand 1']
    #allocation9 [shape = 'u8[2048]{0}', space=vmem, size = 0x800, scoped, tag = 'output window, operand 0']
    #allocation10 [shape = 'u8[2048]{0}', space=vmem, size = 0x800, scoped, tag = 'output window, operand 1']
    #allocation11 [shape = 's32[2]{0}', space=sflag, size = 0x8, scoped, tag = 'scoped memory for fused_forward.1']
    #allocation12 [shape = 'u8[4096]{0}', space=vmem, size = 0x1000, scoped, tag = 'output window, operand 2']
    %10 = vsyncpa [#allocation7], 0
    %11 = vsyncpa [#allocation5], 0
    %s12 = scalar_lea.sflag [#allocation5], 1
    %13 = vsyncpa %s12, 0
    %14 = vsyncpa [#allocation6], 0
    %s15 = scalar_lea.sflag [#allocation6], 1
    %16 = vsyncpa %s15, 0
    %17 = vsyncpa [#allocation11], 0
    %s18 = scalar_lea.sflag [#allocation11], 1
    %19 = vsyncpa %s18, 0
    loop: start=0, step=1, limit=4
    $region2: #{fused_forward.1} parent=1 // loop_pre_header
      _
    $region3: #{fused_forward.1} parent=1 // loop_header
      %s21 = sphi 0, %s25
      %p22 = scmp.ge.s32.totalorder %s21, 4
      %s29 = sphi 0, %s29
      %s31 = sphi 0, %s29
      %s32 = sphi 0, %s31
      %s46 = sphi 0, %s32
      %s52 = sphi 0, %s54
      %s55 = sphi 0, %s52
      %s56 = sphi 0, %s55
      %s72 = sphi 0, %s56
      %s78 = sphi 0, %s80
      %s81 = sphi 0, %s78
      %s82 = sphi 0, %s81
      %s98 = sphi 0, %s82
      %s104 = sphi 0, %s106
      %s107 = sphi 0, %s104
      %s108 = sphi 0, %s107
      %s124 = sphi 0, %s108
      %s130 = sphi 0, %s132
      %s133 = sphi 0, %s130
      %s134 = sphi 0, %s133
      %s150 = sphi 0, %s134
    $region4: #{fused_forward.1} parent=1 // loop_header_branch
      %24 = sbr.rel (%p22) target = $region8
    $region5: #{fused_forward.1} parent=1 // loop_body
      %s26 = ssub.s32 %s21, 1
      %s27 = ssub.s32 %s21, 2
      %s28 = sadd.s32 %s21, 1
      %s30 = sadd.s32 %s29, 1
      %p33 = scmp.eq.s32.totalorder %s21, 1
      %p34 = scmp.ne.s32.totalorder %s29, %s31
      %p35 = scmp.eq.s32.totalorder %s21, 0
      %p36 = por %p34, %p35
      %p37 = scmp.ne.s32.totalorder %s29, %s31
      %p38 = scmp.eq.s32.totalorder %s26, 1
      %p39 = por %p37, %p38
      %p40 = scmp.ne.s32.totalorder %s31, %s32
      %p41 = scmp.eq.s32.totalorder %s26, 0
      %p42 = por %p40, %p41
      %p43 = scmp.ne.s32.totalorder %s31, %s32
      %p44 = scmp.eq.s32.totalorder %s27, 1
      %p45 = por %p43, %p44
      %p47 = scmp.ne.s32.totalorder %s32, %s46
      %p48 = scmp.eq.s32.totalorder %s27, 0
      %p49 = por %p47, %p48
      %s50 = ssub.s32 %s21, %s28
      %p51 = scmp.eq.s32.totalorder %s50, 0
      %s53 = sadd.s32 %s52, 1
      %s54 = scalar_select %p51, %s52, %s53
      %p57 = pneg %p51
      %p58 = scmp.eq.s32.totalorder %s21, 1
      %p59 = por %p57, %p58
      %p60 = scmp.ne.s32.totalorder %s52, %s55
      %p61 = scmp.eq.s32.totalorder %s21, 0
      %p62 = por %p60, %p61
      %p63 = scmp.ne.s32.totalorder %s52, %s55
      %p64 = scmp.eq.s32.totalorder %s26, 1
      %p65 = por %p63, %p64
      %p66 = scmp.ne.s32.totalorder %s55, %s56
      %p67 = scmp.eq.s32.totalorder %s26, 0
      %p68 = por %p66, %p67
      %p69 = scmp.ne.s32.totalorder %s55, %s56
      %p70 = scmp.eq.s32.totalorder %s27, 1
      %p71 = por %p69, %p70
      %p73 = scmp.ne.s32.totalorder %s56, %s72
      %p74 = scmp.eq.s32.totalorder %s27, 0
      %p75 = por %p73, %p74
      %s76 = ssub.s32 %s21, %s28
      %p77 = scmp.eq.s32.totalorder %s76, 0
      %s79 = sadd.s32 %s78, 1
      %s80 = scalar_select %p77, %s78, %s79
      %p83 = pneg %p77
      %p84 = scmp.eq.s32.totalorder %s21, 1
      %p85 = por %p83, %p84
      %p86 = scmp.ne.s32.totalorder %s78, %s81
      %p87 = scmp.eq.s32.totalorder %s21, 0
      %p88 = por %p86, %p87
      %p89 = scmp.ne.s32.totalorder %s78, %s81
      %p90 = scmp.eq.s32.totalorder %s26, 1
      %p91 = por %p89, %p90
      %p92 = scmp.ne.s32.totalorder %s81, %s82
      %p93 = scmp.eq.s32.totalorder %s26, 0
      %p94 = por %p92, %p93
      %p95 = scmp.ne.s32.totalorder %s81, %s82
      %p96 = scmp.eq.s32.totalorder %s27, 1
      %p97 = por %p95, %p96
      %p99 = scmp.ne.s32.totalorder %s82, %s98
      %p100 = scmp.eq.s32.totalorder %s27, 0
      %p101 = por %p99, %p100
      %s102 = ssub.s32 %s21, %s28
      %p103 = scmp.eq.s32.totalorder %s102, 0
      %s105 = sadd.s32 %s104, 1
      %s106 = scalar_select %p103, %s104, %s105
      %p109 = pneg %p103
      %p110 = scmp.eq.s32.totalorder %s21, 1
      %p111 = por %p109, %p110
      %p112 = scmp.ne.s32.totalorder %s104, %s107
      %p113 = scmp.eq.s32.totalorder %s21, 0
      %p114 = por %p112, %p113
      %p115 = scmp.ne.s32.totalorder %s104, %s107
      %p116 = scmp.eq.s32.totalorder %s26, 1
      %p117 = por %p115, %p116
      %p118 = scmp.ne.s32.totalorder %s107, %s108
      %p119 = scmp.eq.s32.totalorder %s26, 0
      %p120 = por %p118, %p119
      %p121 = scmp.ne.s32.totalorder %s107, %s108
      %p122 = scmp.eq.s32.totalorder %s27, 1
      %p123 = por %p121, %p122
      %p125 = scmp.ne.s32.totalorder %s108, %s124
      %p126 = scmp.eq.s32.totalorder %s27, 0
      %p127 = por %p125, %p126
      %s128 = ssub.s32 %s21, %s28
      %p129 = scmp.eq.s32.totalorder %s128, 0
      %s131 = sadd.s32 %s130, 1
      %s132 = scalar_select %p129, %s130, %s131
      %p135 = pneg %p129
      %p136 = scmp.eq.s32.totalorder %s21, 1
      %p137 = por %p135, %p136
      %p138 = scmp.ne.s32.totalorder %s130, %s133
      %p139 = scmp.eq.s32.totalorder %s21, 0
      %p140 = por %p138, %p139
      %p141 = scmp.ne.s32.totalorder %s130, %s133
      %p142 = scmp.eq.s32.totalorder %s26, 1
      %p143 = por %p141, %p142
      %p144 = scmp.ne.s32.totalorder %s133, %s134
      %p145 = scmp.eq.s32.totalorder %s26, 0
      %p146 = por %p144, %p145
      %p147 = scmp.ne.s32.totalorder %s133, %s134
      %p148 = scmp.eq.s32.totalorder %s27, 1
      %p149 = por %p147, %p148
      %p151 = scmp.ne.s32.totalorder %s134, %s150
      %p152 = scmp.eq.s32.totalorder %s27, 0
      %p153 = por %p151, %p152
      %p154 = scmp.le.s32.totalorder 1, %s21
      %p155 = scmp.lt.s32.totalorder %s21, 3
      %p156 = pnand %p154, %p155
      %p157 = pneg %p156
      // Predicated region
      $region9: #{fused_forward.1} parent=5 // pred_check
        _
      $region10: #{fused_forward.1} parent=5 // pred_check_branch
        %159 = sbr.rel (%p156) target = $region12
      $region11: #{fused_forward.1} parent=5 // pred_region
        %s160 = ssub.s32 %s21, 1
        // Predicated region
        $region13: #{fused_forward.1} parent=11 // pred_check
          %p161 = pneg %p42
        $region14: #{fused_forward.1} parent=11 // pred_check_branch
          %163 = sbr.rel (%p161) target = $region16
        $region15: #{fused_forward.1} parent=11 // pred_region
          %165 = vsyncadd [#allocation7], 0
          %s167 = sshll.u32 %s0, 4
          %s168 = int_to_ptr.hbm [resolvable:$true] %s167
          %170 = dma.hbm_to_smem %s168, 16, [#allocation4], [#allocation7]
        $region16: #{fused_forward.1} parent=11 // pred_fallthru
          _
      $region12: #{fused_forward.1} parent=5 // pred_fallthru
        _
      %p171 = scmp.lt.s32.totalorder %s21, 2
      // Predicated region
      $region17: #{fused_forward.1} parent=5 // pred_check
        %p172 = pneg %p171
      $region18: #{fused_forward.1} parent=5 // pred_check_branch
        %174 = sbr.rel (%p172) target = $region20
      $region19: #{fused_forward.1} parent=5 // pred_region
        // Predicated region
        $region21: #{fused_forward.1} parent=19 // pred_check
          %p175 = pneg %p62
        $region22: #{fused_forward.1} parent=19 // pred_check_branch
          %177 = sbr.rel (%p175) target = $region24
        $region23: #{fused_forward.1} parent=19 // pred_region
          %s178 = sand.u32 %s52, 1
          %s179 = scalar_lea.sflag [#allocation5], %s178
          %s180 = sand.u32 %s52, 1
          %s181 = smul.addr %s180, 64
          %s182 = scalar_lea.vmem [#allocation8], %s181
          %184 = vsyncadd %s179, 0
          %s185 = smul.addr %s21, 8
          %s186 = smul.addr %s185, 8
          %s187 = scalar_lea.hbm %s1, %s186
          %s188 = sshll.u32 %s187, 4
          %s189 = int_to_ptr.hbm [resolvable:$true] %s188
          %s190 = sshll.u32 %s182, 4
          %s191 = int_to_ptr.vmem [resolvable:$true] %s190
          %196 = dma.hbm_to_vmem [thread:$0]  %s189, 1024, %s191, %s179, 128, 128, 8
        $region24: #{fused_forward.1} parent=19 // pred_fallthru
          _
      $region20: #{fused_forward.1} parent=5 // pred_fallthru
        _
      %p197 = scmp.le.s32.totalorder 1, %s21
      %p198 = scmp.lt.s32.totalorder %s21, 3
      %p199 = pnand %p197, %p198
      %p200 = pneg %p199
      // Predicated region
      $region25: #{fused_forward.1} parent=5 // pred_check
        _
      $region26: #{fused_forward.1} parent=5 // pred_check_branch
        %202 = sbr.rel (%p199) target = $region28
      $region27: #{fused_forward.1} parent=5 // pred_region
        %s203 = ssub.s32 %s21, 1
        // Predicated region
        $region29: #{fused_forward.1} parent=27 // pred_check
          %p204 = pneg %p42
        $region30: #{fused_forward.1} parent=27 // pred_check_branch
          %206 = sbr.rel (%p204) target = $region32
        $region31: #{fused_forward.1} parent=27 // pred_region
          %208 = dma.done [#allocation7], 16
        $region32: #{fused_forward.1} parent=27 // pred_fallthru
          _
        %s209 = sand.u32 %s55, 1
        %s210 = scalar_lea.sflag [#allocation5], %s209
        %s211 = sand.u32 %s55, 1
        %s212 = smul.addr %s211, 64
        %s213 = scalar_lea.vmem [#allocation8], %s212
        // Predicated region
        $region33: #{fused_forward.1} parent=27 // pred_check
          %p214 = pneg %p68
        $region34: #{fused_forward.1} parent=27 // pred_check_branch
          %216 = sbr.rel (%p214) target = $region36
        $region35: #{fused_forward.1} parent=27 // pred_region
          %218 = dma.done %s210, 1024
        $region36: #{fused_forward.1} parent=27 // pred_fallthru
          _
        %219 = sfence
        %p220 = pneg %p42
        %p221 = pneg %p39
        %s222 = sand.u32 %s55, 1
        %s223 = scalar_lea.sflag [#allocation5], %s222
        %s224 = sand.u32 %s55, 1
        %s225 = smul.addr %s224, 64
        %s226 = scalar_lea.vmem [#allocation8], %s225
        %p227 = pneg %p68
        %p228 = pneg %p65
        %p229 = pneg %p94
        %p230 = pneg %p91
        %s231 = sand.u32 %s81, 1
        %s232 = scalar_lea.sflag [#allocation6], %s231
        %s233 = sand.u32 %s81, 1
        %s234 = smul.addr %s233, 2
        %s235 = scalar_lea.vmem [#allocation9], %s234
        %p236 = pneg %p120
        %p237 = pneg %p117
        %s238 = sand.u32 %s26, 1
        %s239 = scalar_lea.sflag [#allocation11], %s238
        %s240 = sand.u32 %s107, 1
        %s241 = smul.addr %s240, 2
        %s242 = scalar_lea.vmem [#allocation10], %s241
        %p243 = pneg %p146
        %p244 = pneg %p143
        %s245 = sand.u32 %s26, 1
        %s246 = scalar_lea.sflag [#allocation11], %s245
        %s247 = sand.u32 %s133, 1
        %s248 = smul.addr %s247, 4
        %s249 = scalar_lea.vmem [#allocation12], %s248
        %vm250 = vcmask 146432
        %251 = vst.msk [vmem:[#allocation2] sm:$0xff] %vm250, 0.0
        %252 = vst.msk [vmem:[#allocation2 + $0x8] sm:$0xff] %vm250, 0.0
        %vm253 = vcmask 140288
        %254 = vst.msk [vmem:[#allocation2 + $0x10] sm:$0x3] %vm253, 0.0
        %255 = vst.msk [vmem:[#allocation2 + $0x18] sm:$0xff] %vm250, 0.0
        %256 = vst.msk [vmem:[#allocation2 + $0x20] sm:$0xff] %vm250, 0.0
        %257 = vst.msk [vmem:[#allocation2 + $0x28] sm:$0x3] %vm253, 0.0
        %258 = vst.msk [vmem:[#allocation2 + $0x30] sm:$0xff] %vm250, 0.0
        %259 = vst.msk [vmem:[#allocation2 + $0x38] sm:$0xff] %vm250, 0.0
        %260 = vst.msk [vmem:[#allocation2 + $0x40] sm:$0x3] %vm253, 0.0
        %261 = vst.msk [vmem:[#allocation2 + $0x48] sm:$0xff] %vm250, 0.0
        %262 = vst.msk [vmem:[#allocation2 + $0x50] sm:$0xff] %vm250, 0.0
        %263 = vst.msk [vmem:[#allocation2 + $0x58] sm:$0x3] %vm253, 0.0
        %264 = vst.msk [vmem:[#allocation3] sm:$0xff] %vm250, 0.0
        %265 = vst.msk [vmem:[#allocation3 + $0x8] sm:$0xff] %vm250, 0.0
        %266 = vst.msk [vmem:[#allocation3 + $0x10] sm:$0x3] %vm253, 0.0
        %267 = vst.msk [vmem:[#allocation3 + $0x18] sm:$0xff] %vm250, 0.0
        %268 = vst.msk [vmem:[#allocation3 + $0x20] sm:$0xff] %vm250, 0.0
        %269 = vst.msk [vmem:[#allocation3 + $0x28] sm:$0x3] %vm253, 0.0
        %270 = vst.msk [vmem:[#allocation3 + $0x30] sm:$0xff] %vm250, 0.0
        %271 = vst.msk [vmem:[#allocation3 + $0x38] sm:$0xff] %vm250, 0.0
        %272 = vst.msk [vmem:[#allocation3 + $0x40] sm:$0x3] %vm253, 0.0
        %273 = vst.msk [vmem:[#allocation3 + $0x48] sm:$0xff] %vm250, 0.0
        %274 = vst.msk [vmem:[#allocation3 + $0x50] sm:$0xff] %vm250, 0.0
        %275 = vst.msk [vmem:[#allocation3 + $0x58] sm:$0x3] %vm253, 0.0
        %v276 = vld [vmem:[%s213] sm:$0xff]
        %v277 = vld [vmem:[%s213 + $0x8] sm:$0xff]
        %v278 = vld [vmem:[%s213 + $0x10] sm:$0xff]
        %v279 = vld [vmem:[%s213 + $0x18] sm:$0xff]
        %v280 = vld [vmem:[%s213 + $0x20] sm:$0xff]
        %v281 = vld [vmem:[%s213 + $0x28] sm:$0xff]
        %v282 = vld [vmem:[%s213 + $0x30] sm:$0xff]
        %v283 = vld [vmem:[%s213 + $0x38] sm:$0xff]
        %292 = vrot.lane.b32.xlu0 %v276, 1
        %v293 = vpop.permute.xlu0 %292
        %294 = vrot.lane.b32.xlu0 %v277, 1
        %v295 = vpop.permute.xlu0 %294
        %296 = vrot.lane.b32.xlu0 %v278, 1
        %v297 = vpop.permute.xlu0 %296
        %298 = vrot.lane.b32.xlu0 %v279, 1
        %v299 = vpop.permute.xlu0 %298
        %300 = vrot.lane.b32.xlu0 %v280, 1
        %v301 = vpop.permute.xlu0 %300
        %302 = vrot.lane.b32.xlu0 %v281, 1
        %v303 = vpop.permute.xlu0 %302
        %304 = vrot.lane.b32.xlu0 %v282, 1
        %v305 = vpop.permute.xlu0 %304
        %306 = vrot.lane.b32.xlu0 %v283, 1
        %v307 = vpop.permute.xlu0 %306
        %vm316 = vcmask 138248
        %317 = vst.msk [vmem:[#allocation2 + $0x1] sm:$0xff] %vm316, %v293
        %318 = vst.msk [vmem:[#allocation2 + $0x9] sm:$0xff] %vm316, %v295
        %319 = vst.msk [vmem:[#allocation2 + $0x19] sm:$0xff] %vm316, %v297
        %320 = vst.msk [vmem:[#allocation2 + $0x21] sm:$0xff] %vm316, %v299
        %321 = vst.msk [vmem:[#allocation2 + $0x31] sm:$0xff] %vm316, %v301
        %322 = vst.msk [vmem:[#allocation2 + $0x39] sm:$0xff] %vm316, %v303
        %323 = vst.msk [vmem:[#allocation2 + $0x49] sm:$0xff] %vm316, %v305
        %324 = vst.msk [vmem:[#allocation2 + $0x51] sm:$0xff] %vm316, %v307
        %v325 = vld [vmem:[#allocation2] sm:$0xff]
        %v326 = vld [vmem:[#allocation2 + $0x8] sm:$0xff]
        %v327 = vld [vmem:[#allocation2 + $0x10] sm:$0x3]
        %v328 = vld [vmem:[#allocation2 + $0x18] sm:$0xff]
        %v329 = vld [vmem:[#allocation2 + $0x20] sm:$0xff]
        %v330 = vld [vmem:[#allocation2 + $0x28] sm:$0x3]
        %v331 = vld [vmem:[#allocation2 + $0x30] sm:$0xff]
        %v332 = vld [vmem:[#allocation2 + $0x38] sm:$0xff]
        %v333 = vld [vmem:[#allocation2 + $0x40] sm:$0x3]
        %v334 = vld [vmem:[#allocation2 + $0x48] sm:$0xff]
        %v335 = vld [vmem:[#allocation2 + $0x50] sm:$0xff]
        %v336 = vld [vmem:[#allocation2 + $0x58] sm:$0x3]
        %s337 = sld [smem:[#allocation4]]
        %v338 = vstv %s337
        %v339 = vmul.f32 %v338, %v325
        %v340 = vmul.f32 %v338, %v326
        %v341 = vmul.f32 %v338, %v328
        %v342 = vmul.f32 %v338, %v329
        %v343 = vmul.f32 %v338, %v331
        %v344 = vmul.f32 %v338, %v332
        %v345 = vmul.f32 %v338, %v334
        %v346 = vmul.f32 %v338, %v335
        %s347 = sld [smem:[#allocation4 + $0x1]]
        %v348 = vstv %s347
        %v349 = vmul.f32 %v348, %v325
        %v350 = vmul.f32 %v348, %v326
        %v351 = vmul.f32 %v348, %v328
        %v352 = vmul.f32 %v348, %v329
        %v353 = vmul.f32 %v348, %v331
        %v354 = vmul.f32 %v348, %v332
        %v355 = vmul.f32 %v348, %v334
        %v356 = vmul.f32 %v348, %v335
        %365 = vrot.lane.b32.xlu0 %v349, 127
        %v366 = vpop.permute.xlu0 %365
        %367 = vrot.lane.b32.xlu0 %v350, 127
        %v368 = vpop.permute.xlu0 %367
        %369 = vrot.lane.b32.xlu0 %v351, 127
        %v370 = vpop.permute.xlu0 %369
        %371 = vrot.lane.b32.xlu0 %v352, 127
        %v372 = vpop.permute.xlu0 %371
        %373 = vrot.lane.b32.xlu0 %v353, 127
        %v374 = vpop.permute.xlu0 %373
        %375 = vrot.lane.b32.xlu0 %v354, 127
        %v376 = vpop.permute.xlu0 %375
        %377 = vrot.lane.b32.xlu0 %v355, 127
        %v378 = vpop.permute.xlu0 %377
        %379 = vrot.lane.b32.xlu0 %v356, 127
        %v380 = vpop.permute.xlu0 %379
        %v389 = vadd.f32 %v339, %v366
        %v390 = vadd.f32 %v340, %v368
        %v391 = vadd.f32 %v341, %v370
        %v392 = vadd.f32 %v342, %v372
        %v393 = vadd.f32 %v343, %v374
        %v394 = vadd.f32 %v344, %v376
        %v395 = vadd.f32 %v345, %v378
        %v396 = vadd.f32 %v346, %v380
        %s397 = sld [smem:[#allocation4 + $0x2]]
        %v398 = vstv %s397
        %v399 = vmul.f32 %v398, %v325
        %v400 = vmul.f32 %v398, %v326
        %v401 = vmul.f32 %v398, %v328
        %v402 = vmul.f32 %v398, %v329
        %v403 = vmul.f32 %v398, %v331
        %v404 = vmul.f32 %v398, %v332
        %v405 = vmul.f32 %v398, %v334
        %v406 = vmul.f32 %v398, %v335
        %415 = vrot.lane.b32.xlu0 %v399, 126
        %v416 = vpop.permute.xlu0 %415
        %417 = vrot.lane.b32.xlu0 %v400, 126
        %v418 = vpop.permute.xlu0 %417
        %419 = vrot.lane.b32.xlu0 %v401, 126
        %v420 = vpop.permute.xlu0 %419
        %421 = vrot.lane.b32.xlu0 %v402, 126
        %v422 = vpop.permute.xlu0 %421
        %423 = vrot.lane.b32.xlu0 %v403, 126
        %v424 = vpop.permute.xlu0 %423
        %425 = vrot.lane.b32.xlu0 %v404, 126
        %v426 = vpop.permute.xlu0 %425
        %427 = vrot.lane.b32.xlu0 %v405, 126
        %v428 = vpop.permute.xlu0 %427
        %429 = vrot.lane.b32.xlu0 %v406, 126
        %v430 = vpop.permute.xlu0 %429
        %v439 = vadd.f32 %v389, %v416
        %v440 = vadd.f32 %v390, %v418
        %v441 = vadd.f32 %v391, %v420
        %v442 = vadd.f32 %v392, %v422
        %v443 = vadd.f32 %v393, %v424
        %v444 = vadd.f32 %v394, %v426
        %v445 = vadd.f32 %v395, %v428
        %v446 = vadd.f32 %v396, %v430
        %s447 = sld [smem:[#allocation4 + $0x3]]
        %v448 = vstv %s447
        %v449 = vmul.f32 %v448, %v325
        %v450 = vmul.f32 %v448, %v326
        %v451 = vmul.f32 %v448, %v327
        %v452 = vmul.f32 %v448, %v328
        %v453 = vmul.f32 %v448, %v329
        %v454 = vmul.f32 %v448, %v330
        %v455 = vmul.f32 %v448, %v331
        %v456 = vmul.f32 %v448, %v332
        %v457 = vmul.f32 %v448, %v333
        %v458 = vmul.f32 %v448, %v334
        %v459 = vmul.f32 %v448, %v335
        %v460 = vmul.f32 %v448, %v336
        %vm473 = vcmask 1046528
        %v474 = vrot.slane %v449, 1
        %v475 = vrot.slane %v450, 1
        %v476 = vsel %vm473, %v474, %v475
        %v477 = vrot.slane %v451, 1
        %v478 = vsel %vm473, %v475, %v477
        %v479 = vrot.slane %v452, 1
        %v480 = vrot.slane %v453, 1
        %v481 = vsel %vm473, %v479, %v480
        %v482 = vrot.slane %v454, 1
        %v483 = vsel %vm473, %v480, %v482
        %v484 = vrot.slane %v455, 1
        %v485 = vrot.slane %v456, 1
        %v486 = vsel %vm473, %v484, %v485
        %v487 = vrot.slane %v457, 1
        %v488 = vsel %vm473, %v485, %v487
        %v489 = vrot.slane %v458, 1
        %v490 = vrot.slane %v459, 1
        %v491 = vsel %vm473, %v489, %v490
        %v492 = vrot.slane %v460, 1
        %v493 = vsel %vm473, %v490, %v492
        %v502 = vadd.f32 %v439, %v476
        %v503 = vadd.f32 %v440, %v478
        %v504 = vadd.f32 %v441, %v481
        %v505 = vadd.f32 %v442, %v483
        %v506 = vadd.f32 %v443, %v486
        %v507 = vadd.f32 %v444, %v488
        %v508 = vadd.f32 %v445, %v491
        %v509 = vadd.f32 %v446, %v493
        %s510 = sld [smem:[#allocation4 + $0x4]]
        %v511 = vstv %s510
        %v512 = vmul.f32 %v511, %v325
        %v513 = vmul.f32 %v511, %v326
        %v514 = vmul.f32 %v511, %v327
        %v515 = vmul.f32 %v511, %v328
        %v516 = vmul.f32 %v511, %v329
        %v517 = vmul.f32 %v511, %v330
        %v518 = vmul.f32 %v511, %v331
        %v519 = vmul.f32 %v511, %v332
        %v520 = vmul.f32 %v511, %v333
        %v521 = vmul.f32 %v511, %v334
        %v522 = vmul.f32 %v511, %v335
        %v523 = vmul.f32 %v511, %v336
        %v536 = vrot.slane %v512, 1
        %v537 = vrot.slane %v513, 1
        %v538 = vsel %vm473, %v536, %v537
        %v539 = vrot.slane %v514, 1
        %v540 = vsel %vm473, %v537, %v539
        %v541 = vrot.slane %v515, 1
        %v542 = vrot.slane %v516, 1
        %v543 = vsel %vm473, %v541, %v542
        %v544 = vrot.slane %v517, 1
        %v545 = vsel %vm473, %v542, %v544
        %v546 = vrot.slane %v518, 1
        %v547 = vrot.slane %v519, 1
        %v548 = vsel %vm473, %v546, %v547
        %v549 = vrot.slane %v520, 1
        %v550 = vsel %vm473, %v547, %v549
        %v551 = vrot.slane %v521, 1
        %v552 = vrot.slane %v522, 1
        %v553 = vsel %vm473, %v551, %v552
        %v554 = vrot.slane %v523, 1
        %v555 = vsel %vm473, %v552, %v554
        %556 = vrot.lane.b32.xlu0 %v538, 127
        %v557 = vpop.permute.xlu0 %556
        %558 = vrot.lane.b32.xlu0 %v540, 127
        %v559 = vpop.permute.xlu0 %558
        %560 = vrot.lane.b32.xlu0 %v543, 127
        %v561 = vpop.permute.xlu0 %560
        %562 = vrot.lane.b32.xlu0 %v545, 127
        %v563 = vpop.permute.xlu0 %562
        %564 = vrot.lane.b32.xlu0 %v548, 127
        %v565 = vpop.permute.xlu0 %564
        %566 = vrot.lane.b32.xlu0 %v550, 127
        %v567 = vpop.permute.xlu0 %566
        %568 = vrot.lane.b32.xlu0 %v553, 127
        %v569 = vpop.permute.xlu0 %568
        %570 = vrot.lane.b32.xlu0 %v555, 127
        %v571 = vpop.permute.xlu0 %570
        %v580 = vadd.f32 %v502, %v557
        %v581 = vadd.f32 %v503, %v559
        %v582 = vadd.f32 %v504, %v561
        %v583 = vadd.f32 %v505, %v563
        %v584 = vadd.f32 %v506, %v565
        %v585 = vadd.f32 %v507, %v567
        %v586 = vadd.f32 %v508, %v569
        %v587 = vadd.f32 %v509, %v571
        %s588 = sld [smem:[#allocation4 + $0x5]]
        %v589 = vstv %s588
        %v590 = vmul.f32 %v589, %v325
        %v591 = vmul.f32 %v589, %v326
        %v592 = vmul.f32 %v589, %v327
        %v593 = vmul.f32 %v589, %v328
        %v594 = vmul.f32 %v589, %v329
        %v595 = vmul.f32 %v589, %v330
        %v596 = vmul.f32 %v589, %v331
        %v597 = vmul.f32 %v589, %v332
        %v598 = vmul.f32 %v589, %v333
        %v599 = vmul.f32 %v589, %v334
        %v600 = vmul.f32 %v589, %v335
        %v601 = vmul.f32 %v589, %v336
        %v614 = vrot.slane %v590, 1
        %v615 = vrot.slane %v591, 1
        %v616 = vsel %vm473, %v614, %v615
        %v617 = vrot.slane %v592, 1
        %v618 = vsel %vm473, %v615, %v617
        %v619 = vrot.slane %v593, 1
        %v620 = vrot.slane %v594, 1
        %v621 = vsel %vm473, %v619, %v620
        %v622 = vrot.slane %v595, 1
        %v623 = vsel %vm473, %v620, %v622
        %v624 = vrot.slane %v596, 1
        %v625 = vrot.slane %v597, 1
        %v626 = vsel %vm473, %v624, %v625
        %v627 = vrot.slane %v598, 1
        %v628 = vsel %vm473, %v625, %v627
        %v629 = vrot.slane %v599, 1
        %v630 = vrot.slane %v600, 1
        %v631 = vsel %vm473, %v629, %v630
        %v632 = vrot.slane %v601, 1
        %v633 = vsel %vm473, %v630, %v632
        %634 = vrot.lane.b32.xlu0 %v616, 126
        %v635 = vpop.permute.xlu0 %634
        %636 = vrot.lane.b32.xlu0 %v618, 126
        %v637 = vpop.permute.xlu0 %636
        %638 = vrot.lane.b32.xlu0 %v621, 126
        %v639 = vpop.permute.xlu0 %638
        %640 = vrot.lane.b32.xlu0 %v623, 126
        %v641 = vpop.permute.xlu0 %640
        %642 = vrot.lane.b32.xlu0 %v626, 126
        %v643 = vpop.permute.xlu0 %642
        %644 = vrot.lane.b32.xlu0 %v628, 126
        %v645 = vpop.permute.xlu0 %644
        %646 = vrot.lane.b32.xlu0 %v631, 126
        %v647 = vpop.permute.xlu0 %646
        %648 = vrot.lane.b32.xlu0 %v633, 126
        %v649 = vpop.permute.xlu0 %648
        %v658 = vadd.f32 %v580, %v635
        %v659 = vadd.f32 %v581, %v637
        %v660 = vadd.f32 %v582, %v639
        %v661 = vadd.f32 %v583, %v641
        %v662 = vadd.f32 %v584, %v643
        %v663 = vadd.f32 %v585, %v645
        %v664 = vadd.f32 %v586, %v647
        %v665 = vadd.f32 %v587, %v649
        %s666 = sld [smem:[#allocation4 + $0x6]]
        %v667 = vstv %s666
        %v668 = vmul.f32 %v667, %v325
        %v669 = vmul.f32 %v667, %v326
        %v670 = vmul.f32 %v667, %v327
        %v671 = vmul.f32 %v667, %v328
        %v672 = vmul.f32 %v667, %v329
        %v673 = vmul.f32 %v667, %v330
        %v674 = vmul.f32 %v667, %v331
        %v675 = vmul.f32 %v667, %v332
        %v676 = vmul.f32 %v667, %v333
        %v677 = vmul.f32 %v667, %v334
        %v678 = vmul.f32 %v667, %v335
        %v679 = vmul.f32 %v667, %v336
        %vm692 = vcmask 1045504
        %v693 = vrot.slane %v668, 2
        %v694 = vrot.slane %v669, 2
        %v695 = vsel %vm692, %v693, %v694
        %v696 = vrot.slane %v670, 2
        %v697 = vsel %vm692, %v694, %v696
        %v698 = vrot.slane %v671, 2
        %v699 = vrot.slane %v672, 2
        %v700 = vsel %vm692, %v698, %v699
        %v701 = vrot.slane %v673, 2
        %v702 = vsel %vm692, %v699, %v701
        %v703 = vrot.slane %v674, 2
        %v704 = vrot.slane %v675, 2
        %v705 = vsel %vm692, %v703, %v704
        %v706 = vrot.slane %v676, 2
        %v707 = vsel %vm692, %v704, %v706
        %v708 = vrot.slane %v677, 2
        %v709 = vrot.slane %v678, 2
        %v710 = vsel %vm692, %v708, %v709
        %v711 = vrot.slane %v679, 2
        %v712 = vsel %vm692, %v709, %v711
        %v721 = vadd.f32 %v658, %v695
        %v722 = vadd.f32 %v659, %v697
        %v723 = vadd.f32 %v660, %v700
        %v724 = vadd.f32 %v661, %v702
        %v725 = vadd.f32 %v662, %v705
        %v726 = vadd.f32 %v663, %v707
        %v727 = vadd.f32 %v664, %v710
        %v728 = vadd.f32 %v665, %v712
        %s729 = sld [smem:[#allocation4 + $0x7]]
        %v730 = vstv %s729
        %v731 = vmul.f32 %v730, %v325
        %v732 = vmul.f32 %v730, %v326
        %v733 = vmul.f32 %v730, %v327
        %v734 = vmul.f32 %v730, %v328
        %v735 = vmul.f32 %v730, %v329
        %v736 = vmul.f32 %v730, %v330
        %v737 = vmul.f32 %v730, %v331
        %v738 = vmul.f32 %v730, %v332
        %v739 = vmul.f32 %v730, %v333
        %v740 = vmul.f32 %v730, %v334
        %v741 = vmul.f32 %v730, %v335
        %v742 = vmul.f32 %v730, %v336
        %v755 = vrot.slane %v731, 2
        %v756 = vrot.slane %v732, 2
        %v757 = vsel %vm692, %v755, %v756
        %v758 = vrot.slane %v733, 2
        %v759 = vsel %vm692, %v756, %v758
        %v760 = vrot.slane %v734, 2
        %v761 = vrot.slane %v735, 2
        %v762 = vsel %vm692, %v760, %v761
        %v763 = vrot.slane %v736, 2
        %v764 = vsel %vm692, %v761, %v763
        %v765 = vrot.slane %v737, 2
        %v766 = vrot.slane %v738, 2
        %v767 = vsel %vm692, %v765, %v766
        %v768 = vrot.slane %v739, 2
        %v769 = vsel %vm692, %v766, %v768
        %v770 = vrot.slane %v740, 2
        %v771 = vrot.slane %v741, 2
        %v772 = vsel %vm692, %v770, %v771
        %v773 = vrot.slane %v742, 2
        %v774 = vsel %vm692, %v771, %v773
        %775 = vrot.lane.b32.xlu0 %v757, 127
        %v776 = vpop.permute.xlu0 %775
        %777 = vrot.lane.b32.xlu0 %v759, 127
        %v778 = vpop.permute.xlu0 %777
        %779 = vrot.lane.b32.xlu0 %v762, 127
        %v780 = vpop.permute.xlu0 %779
        %781 = vrot.lane.b32.xlu0 %v764, 127
        %v782 = vpop.permute.xlu0 %781
        %783 = vrot.lane.b32.xlu0 %v767, 127
        %v784 = vpop.permute.xlu0 %783
        %785 = vrot.lane.b32.xlu0 %v769, 127
        %v786 = vpop.permute.xlu0 %785
        %787 = vrot.lane.b32.xlu0 %v772, 127
        %v788 = vpop.permute.xlu0 %787
        %789 = vrot.lane.b32.xlu0 %v774, 127
        %v790 = vpop.permute.xlu0 %789
        %v799 = vadd.f32 %v721, %v776
        %v800 = vadd.f32 %v722, %v778
        %v801 = vadd.f32 %v723, %v780
        %v802 = vadd.f32 %v724, %v782
        %v803 = vadd.f32 %v725, %v784
        %v804 = vadd.f32 %v726, %v786
        %v805 = vadd.f32 %v727, %v788
        %v806 = vadd.f32 %v728, %v790
        %s807 = sld [smem:[#allocation4 + $0x8]]
        %v808 = vstv %s807
        %v809 = vmul.f32 %v808, %v325
        %v810 = vmul.f32 %v808, %v326
        %v811 = vmul.f32 %v808, %v327
        %v812 = vmul.f32 %v808, %v328
        %v813 = vmul.f32 %v808, %v329
        %v814 = vmul.f32 %v808, %v330
        %v815 = vmul.f32 %v808, %v331
        %v816 = vmul.f32 %v808, %v332
        %v817 = vmul.f32 %v808, %v333
        %v818 = vmul.f32 %v808, %v334
        %v819 = vmul.f32 %v808, %v335
        %v820 = vmul.f32 %v808, %v336
        %v833 = vrot.slane %v809, 2
        %v834 = vrot.slane %v810, 2
        %v835 = vsel %vm692, %v833, %v834
        %v836 = vrot.slane %v811, 2
        %v837 = vsel %vm692, %v834, %v836
        %v838 = vrot.slane %v812, 2
        %v839 = vrot.slane %v813, 2
        %v840 = vsel %vm692, %v838, %v839
        %v841 = vrot.slane %v814, 2
        %v842 = vsel %vm692, %v839, %v841
        %v843 = vrot.slane %v815, 2
        %v844 = vrot.slane %v816, 2
        %v845 = vsel %vm692, %v843, %v844
        %v846 = vrot.slane %v817, 2
        %v847 = vsel %vm692, %v844, %v846
        %v848 = vrot.slane %v818, 2
        %v849 = vrot.slane %v819, 2
        %v850 = vsel %vm692, %v848, %v849
        %v851 = vrot.slane %v820, 2
        %v852 = vsel %vm692, %v849, %v851
        %853 = vrot.lane.b32.xlu0 %v835, 126
        %v854 = vpop.permute.xlu0 %853
        %855 = vrot.lane.b32.xlu0 %v837, 126
        %v856 = vpop.permute.xlu0 %855
        %857 = vrot.lane.b32.xlu0 %v840, 126
        %v858 = vpop.permute.xlu0 %857
        %859 = vrot.lane.b32.xlu0 %v842, 126
        %v860 = vpop.permute.xlu0 %859
        %861 = vrot.lane.b32.xlu0 %v845, 126
        %v862 = vpop.permute.xlu0 %861
        %863 = vrot.lane.b32.xlu0 %v847, 126
        %v864 = vpop.permute.xlu0 %863
        %865 = vrot.lane.b32.xlu0 %v850, 126
        %v866 = vpop.permute.xlu0 %865
        %867 = vrot.lane.b32.xlu0 %v852, 126
        %v868 = vpop.permute.xlu0 %867
        %v877 = vadd.f32 %v799, %v854
        %v878 = vadd.f32 %v800, %v856
        %v879 = vadd.f32 %v801, %v858
        %v880 = vadd.f32 %v802, %v860
        %v881 = vadd.f32 %v803, %v862
        %v882 = vadd.f32 %v804, %v864
        %v883 = vadd.f32 %v805, %v866
        %v884 = vadd.f32 %v806, %v868
        %893 = vrot.lane.b32.xlu0 %v877, 1
        %v894 = vpop.permute.xlu0 %893
        %895 = vrot.lane.b32.xlu0 %v878, 1
        %v896 = vpop.permute.xlu0 %895
        %897 = vrot.lane.b32.xlu0 %v879, 1
        %v898 = vpop.permute.xlu0 %897
        %899 = vrot.lane.b32.xlu0 %v880, 1
        %v900 = vpop.permute.xlu0 %899
        %901 = vrot.lane.b32.xlu0 %v881, 1
        %v902 = vpop.permute.xlu0 %901
        %903 = vrot.lane.b32.xlu0 %v882, 1
        %v904 = vpop.permute.xlu0 %903
        %905 = vrot.lane.b32.xlu0 %v883, 1
        %v906 = vpop.permute.xlu0 %905
        %907 = vrot.lane.b32.xlu0 %v884, 1
        %v908 = vpop.permute.xlu0 %907
        %917 = vst.msk [vmem:[#allocation3 + $0x1] sm:$0xff] %vm316, %v894
        %918 = vst.msk [vmem:[#allocation3 + $0x9] sm:$0xff] %vm316, %v896
        %919 = vst.msk [vmem:[#allocation3 + $0x19] sm:$0xff] %vm316, %v898
        %920 = vst.msk [vmem:[#allocation3 + $0x21] sm:$0xff] %vm316, %v900
        %921 = vst.msk [vmem:[#allocation3 + $0x31] sm:$0xff] %vm316, %v902
        %922 = vst.msk [vmem:[#allocation3 + $0x39] sm:$0xff] %vm316, %v904
        %923 = vst.msk [vmem:[#allocation3 + $0x49] sm:$0xff] %vm316, %v906
        %924 = vst.msk [vmem:[#allocation3 + $0x51] sm:$0xff] %vm316, %v908
        %v925 = vld [vmem:[#allocation3] sm:$0xff]
        %v926 = vld [vmem:[#allocation3 + $0x8] sm:$0xff]
        %v927 = vld [vmem:[#allocation3 + $0x10] sm:$0x3]
        %v928 = vld [vmem:[#allocation3 + $0x18] sm:$0xff]
        %v929 = vld [vmem:[#allocation3 + $0x20] sm:$0xff]
        %v930 = vld [vmem:[#allocation3 + $0x28] sm:$0x3]
        %v931 = vld [vmem:[#allocation3 + $0x30] sm:$0xff]
        %v932 = vld [vmem:[#allocation3 + $0x38] sm:$0xff]
        %v933 = vld [vmem:[#allocation3 + $0x40] sm:$0x3]
        %v934 = vld [vmem:[#allocation3 + $0x48] sm:$0xff]
        %v935 = vld [vmem:[#allocation3 + $0x50] sm:$0xff]
        %v936 = vld [vmem:[#allocation3 + $0x58] sm:$0x3]
        %s937 = sld [smem:[#allocation4 + $0x9]]
        %v938 = vstv %s937
        %v939 = vmul.f32 %v938, %v925
        %v940 = vmul.f32 %v938, %v926
        %v941 = vmul.f32 %v938, %v928
        %v942 = vmul.f32 %v938, %v929
        %v943 = vmul.f32 %v938, %v931
        %v944 = vmul.f32 %v938, %v932
        %v945 = vmul.f32 %v938, %v934
        %v946 = vmul.f32 %v938, %v935
        %s947 = sld [smem:[#allocation4 + $0xa]]
        %v948 = vstv %s947
        %v949 = vmul.f32 %v948, %v925
        %v950 = vmul.f32 %v948, %v926
        %v951 = vmul.f32 %v948, %v928
        %v952 = vmul.f32 %v948, %v929
        %v953 = vmul.f32 %v948, %v931
        %v954 = vmul.f32 %v948, %v932
        %v955 = vmul.f32 %v948, %v934
        %v956 = vmul.f32 %v948, %v935
        %965 = vrot.lane.b32.xlu0 %v949, 127
        %v966 = vpop.permute.xlu0 %965
        %967 = vrot.lane.b32.xlu0 %v950, 127
        %v968 = vpop.permute.xlu0 %967
        %969 = vrot.lane.b32.xlu0 %v951, 127
        %v970 = vpop.permute.xlu0 %969
        %971 = vrot.lane.b32.xlu0 %v952, 127
        %v972 = vpop.permute.xlu0 %971
        %973 = vrot.lane.b32.xlu0 %v953, 127
        %v974 = vpop.permute.xlu0 %973
        %975 = vrot.lane.b32.xlu0 %v954, 127
        %v976 = vpop.permute.xlu0 %975
        %977 = vrot.lane.b32.xlu0 %v955, 127
        %v978 = vpop.permute.xlu0 %977
        %979 = vrot.lane.b32.xlu0 %v956, 127
        %v980 = vpop.permute.xlu0 %979
        %v989 = vadd.f32 %v939, %v966
        %v990 = vadd.f32 %v940, %v968
        %v991 = vadd.f32 %v941, %v970
        %v992 = vadd.f32 %v942, %v972
        %v993 = vadd.f32 %v943, %v974
        %v994 = vadd.f32 %v944, %v976
        %v995 = vadd.f32 %v945, %v978
        %v996 = vadd.f32 %v946, %v980
        %s997 = sld [smem:[#allocation4 + $0xb]]
        %v998 = vstv %s997
        %v999 = vmul.f32 %v998, %v925
        %v1000 = vmul.f32 %v998, %v926
        %v1001 = vmul.f32 %v998, %v928
        %v1002 = vmul.f32 %v998, %v929
        %v1003 = vmul.f32 %v998, %v931
        %v1004 = vmul.f32 %v998, %v932
        %v1005 = vmul.f32 %v998, %v934
        %v1006 = vmul.f32 %v998, %v935
        %1015 = vrot.lane.b32.xlu0 %v999, 126
        %v1016 = vpop.permute.xlu0 %1015
        %1017 = vrot.lane.b32.xlu0 %v1000, 126
        %v1018 = vpop.permute.xlu0 %1017
        %1019 = vrot.lane.b32.xlu0 %v1001, 126
        %v1020 = vpop.permute.xlu0 %1019
        %1021 = vrot.lane.b32.xlu0 %v1002, 126
        %v1022 = vpop.permute.xlu0 %1021
        %1023 = vrot.lane.b32.xlu0 %v1003, 126
        %v1024 = vpop.permute.xlu0 %1023
        %1025 = vrot.lane.b32.xlu0 %v1004, 126
        %v1026 = vpop.permute.xlu0 %1025
        %1027 = vrot.lane.b32.xlu0 %v1005, 126
        %v1028 = vpop.permute.xlu0 %1027
        %1029 = vrot.lane.b32.xlu0 %v1006, 126
        %v1030 = vpop.permute.xlu0 %1029
        %v1039 = vadd.f32 %v989, %v1016
        %v1040 = vadd.f32 %v990, %v1018
        %v1041 = vadd.f32 %v991, %v1020
        %v1042 = vadd.f32 %v992, %v1022
        %v1043 = vadd.f32 %v993, %v1024
        %v1044 = vadd.f32 %v994, %v1026
        %v1045 = vadd.f32 %v995, %v1028
        %v1046 = vadd.f32 %v996, %v1030
        %s1047 = sld [smem:[#allocation4 + $0xc]]
        %v1048 = vstv %s1047
        %v1049 = vmul.f32 %v1048, %v925
        %v1050 = vmul.f32 %v1048, %v926
        %v1051 = vmul.f32 %v1048, %v927
        %v1052 = vmul.f32 %v1048, %v928
        %v1053 = vmul.f32 %v1048, %v929
        %v1054 = vmul.f32 %v1048, %v930
        %v1055 = vmul.f32 %v1048, %v931
        %v1056 = vmul.f32 %v1048, %v932
        %v1057 = vmul.f32 %v1048, %v933
        %v1058 = vmul.f32 %v1048, %v934
        %v1059 = vmul.f32 %v1048, %v935
        %v1060 = vmul.f32 %v1048, %v936
        %v1073 = vrot.slane %v1049, 1
        %v1074 = vrot.slane %v1050, 1
        %v1075 = vsel %vm473, %v1073, %v1074
        %v1076 = vrot.slane %v1051, 1
        %v1077 = vsel %vm473, %v1074, %v1076
        %v1078 = vrot.slane %v1052, 1
        %v1079 = vrot.slane %v1053, 1
        %v1080 = vsel %vm473, %v1078, %v1079
        %v1081 = vrot.slane %v1054, 1
        %v1082 = vsel %vm473, %v1079, %v1081
        %v1083 = vrot.slane %v1055, 1
        %v1084 = vrot.slane %v1056, 1
        %v1085 = vsel %vm473, %v1083, %v1084
        %v1086 = vrot.slane %v1057, 1
        %v1087 = vsel %vm473, %v1084, %v1086
        %v1088 = vrot.slane %v1058, 1
        %v1089 = vrot.slane %v1059, 1
        %v1090 = vsel %vm473, %v1088, %v1089
        %v1091 = vrot.slane %v1060, 1
        %v1092 = vsel %vm473, %v1089, %v1091
        %v1101 = vadd.f32 %v1039, %v1075
        %v1102 = vadd.f32 %v1040, %v1077
        %v1103 = vadd.f32 %v1041, %v1080
        %v1104 = vadd.f32 %v1042, %v1082
        %v1105 = vadd.f32 %v1043, %v1085
        %v1106 = vadd.f32 %v1044, %v1087
        %v1107 = vadd.f32 %v1045, %v1090
        %v1108 = vadd.f32 %v1046, %v1092
        %s1109 = sld [smem:[#allocation4 + $0xd]]
        %v1110 = vstv %s1109
        %v1111 = vmul.f32 %v1110, %v925
        %v1112 = vmul.f32 %v1110, %v926
        %v1113 = vmul.f32 %v1110, %v927
        %v1114 = vmul.f32 %v1110, %v928
        %v1115 = vmul.f32 %v1110, %v929
        %v1116 = vmul.f32 %v1110, %v930
        %v1117 = vmul.f32 %v1110, %v931
        %v1118 = vmul.f32 %v1110, %v932
        %v1119 = vmul.f32 %v1110, %v933
        %v1120 = vmul.f32 %v1110, %v934
        %v1121 = vmul.f32 %v1110, %v935
        %v1122 = vmul.f32 %v1110, %v936
        %v1135 = vrot.slane %v1111, 1
        %v1136 = vrot.slane %v1112, 1
        %v1137 = vsel %vm473, %v1135, %v1136
        %v1138 = vrot.slane %v1113, 1
        %v1139 = vsel %vm473, %v1136, %v1138
        %v1140 = vrot.slane %v1114, 1
        %v1141 = vrot.slane %v1115, 1
        %v1142 = vsel %vm473, %v1140, %v1141
        %v1143 = vrot.slane %v1116, 1
        %v1144 = vsel %vm473, %v1141, %v1143
        %v1145 = vrot.slane %v1117, 1
        %v1146 = vrot.slane %v1118, 1
        %v1147 = vsel %vm473, %v1145, %v1146
        %v1148 = vrot.slane %v1119, 1
        %v1149 = vsel %vm473, %v1146, %v1148
        %v1150 = vrot.slane %v1120, 1
        %v1151 = vrot.slane %v1121, 1
        %v1152 = vsel %vm473, %v1150, %v1151
        %v1153 = vrot.slane %v1122, 1
        %v1154 = vsel %vm473, %v1151, %v1153
        %1155 = vrot.lane.b32.xlu0 %v1137, 127
        %v1156 = vpop.permute.xlu0 %1155
        %1157 = vrot.lane.b32.xlu0 %v1139, 127
        %v1158 = vpop.permute.xlu0 %1157
        %1159 = vrot.lane.b32.xlu0 %v1142, 127
        %v1160 = vpop.permute.xlu0 %1159
        %1161 = vrot.lane.b32.xlu0 %v1144, 127
        %v1162 = vpop.permute.xlu0 %1161
        %1163 = vrot.lane.b32.xlu0 %v1147, 127
        %v1164 = vpop.permute.xlu0 %1163
        %1165 = vrot.lane.b32.xlu0 %v1149, 127
        %v1166 = vpop.permute.xlu0 %1165
        %1167 = vrot.lane.b32.xlu0 %v1152, 127
        %v1168 = vpop.permute.xlu0 %1167
        %1169 = vrot.lane.b32.xlu0 %v1154, 127
        %v1170 = vpop.permute.xlu0 %1169
        %v1179 = vadd.f32 %v1101, %v1156
        %v1180 = vadd.f32 %v1102, %v1158
        %v1181 = vadd.f32 %v1103, %v1160
        %v1182 = vadd.f32 %v1104, %v1162
        %v1183 = vadd.f32 %v1105, %v1164
        %v1184 = vadd.f32 %v1106, %v1166
        %v1185 = vadd.f32 %v1107, %v1168
        %v1186 = vadd.f32 %v1108, %v1170
        %s1187 = sld [smem:[#allocation4 + $0xe]]
        %v1188 = vstv %s1187
        %v1189 = vmul.f32 %v1188, %v925
        %v1190 = vmul.f32 %v1188, %v926
        %v1191 = vmul.f32 %v1188, %v927
        %v1192 = vmul.f32 %v1188, %v928
        %v1193 = vmul.f32 %v1188, %v929
        %v1194 = vmul.f32 %v1188, %v930
        %v1195 = vmul.f32 %v1188, %v931
        %v1196 = vmul.f32 %v1188, %v932
        %v1197 = vmul.f32 %v1188, %v933
        %v1198 = vmul.f32 %v1188, %v934
        %v1199 = vmul.f32 %v1188, %v935
        %v1200 = vmul.f32 %v1188, %v936
        %v1213 = vrot.slane %v1189, 1
        %v1214 = vrot.slane %v1190, 1
        %v1215 = vsel %vm473, %v1213, %v1214
        %v1216 = vrot.slane %v1191, 1
        %v1217 = vsel %vm473, %v1214, %v1216
        %v1218 = vrot.slane %v1192, 1
        %v1219 = vrot.slane %v1193, 1
        %v1220 = vsel %vm473, %v1218, %v1219
        %v1221 = vrot.slane %v1194, 1
        %v1222 = vsel %vm473, %v1219, %v1221
        %v1223 = vrot.slane %v1195, 1
        %v1224 = vrot.slane %v1196, 1
        %v1225 = vsel %vm473, %v1223, %v1224
        %v1226 = vrot.slane %v1197, 1
        %v1227 = vsel %vm473, %v1224, %v1226
        %v1228 = vrot.slane %v1198, 1
        %v1229 = vrot.slane %v1199, 1
        %v1230 = vsel %vm473, %v1228, %v1229
        %v1231 = vrot.slane %v1200, 1
        %v1232 = vsel %vm473, %v1229, %v1231
        %1233 = vrot.lane.b32.xlu0 %v1215, 126
        %v1234 = vpop.permute.xlu0 %1233
        %1235 = vrot.lane.b32.xlu0 %v1217, 126
        %v1236 = vpop.permute.xlu0 %1235
        %1237 = vrot.lane.b32.xlu0 %v1220, 126
        %v1238 = vpop.permute.xlu0 %1237
        %1239 = vrot.lane.b32.xlu0 %v1222, 126
        %v1240 = vpop.permute.xlu0 %1239
        %1241 = vrot.lane.b32.xlu0 %v1225, 126
        %v1242 = vpop.permute.xlu0 %1241
        %1243 = vrot.lane.b32.xlu0 %v1227, 126
        %v1244 = vpop.permute.xlu0 %1243
        %1245 = vrot.lane.b32.xlu0 %v1230, 126
        %v1246 = vpop.permute.xlu0 %1245
        %1247 = vrot.lane.b32.xlu0 %v1232, 126
        %v1248 = vpop.permute.xlu0 %1247
        %v1257 = vadd.f32 %v1179, %v1234
        %v1258 = vadd.f32 %v1180, %v1236
        %v1259 = vadd.f32 %v1181, %v1238
        %v1260 = vadd.f32 %v1182, %v1240
        %v1261 = vadd.f32 %v1183, %v1242
        %v1262 = vadd.f32 %v1184, %v1244
        %v1263 = vadd.f32 %v1185, %v1246
        %v1264 = vadd.f32 %v1186, %v1248
        %s1265 = sld [smem:[#allocation4 + $0xf]]
        %v1266 = vstv %s1265
        %v1267 = vmul.f32 %v1266, %v925
        %v1268 = vmul.f32 %v1266, %v926
        %v1269 = vmul.f32 %v1266, %v927
        %v1270 = vmul.f32 %v1266, %v928
        %v1271 = vmul.f32 %v1266, %v929
        %v1272 = vmul.f32 %v1266, %v930
        %v1273 = vmul.f32 %v1266, %v931
        %v1274 = vmul.f32 %v1266, %v932
        %v1275 = vmul.f32 %v1266, %v933
        %v1276 = vmul.f32 %v1266, %v934
        %v1277 = vmul.f32 %v1266, %v935
        %v1278 = vmul.f32 %v1266, %v936
        %v1291 = vrot.slane %v1267, 2
        %v1292 = vrot.slane %v1268, 2
        %v1293 = vsel %vm692, %v1291, %v1292
        %v1294 = vrot.slane %v1269, 2
        %v1295 = vsel %vm692, %v1292, %v1294
        %v1296 = vrot.slane %v1270, 2
        %v1297 = vrot.slane %v1271, 2
        %v1298 = vsel %vm692, %v1296, %v1297
        %v1299 = vrot.slane %v1272, 2
        %v1300 = vsel %vm692, %v1297, %v1299
        %v1301 = vrot.slane %v1273, 2
        %v1302 = vrot.slane %v1274, 2
        %v1303 = vsel %vm692, %v1301, %v1302
        %v1304 = vrot.slane %v1275, 2
        %v1305 = vsel %vm692, %v1302, %v1304
        %v1306 = vrot.slane %v1276, 2
        %v1307 = vrot.slane %v1277, 2
        %v1308 = vsel %vm692, %v1306, %v1307
        %v1309 = vrot.slane %v1278, 2
        %v1310 = vsel %vm692, %v1307, %v1309
        %v1319 = vadd.f32 %v1257, %v1293
        %v1320 = vadd.f32 %v1258, %v1295
        %v1321 = vadd.f32 %v1259, %v1298
        %v1322 = vadd.f32 %v1260, %v1300
        %v1323 = vadd.f32 %v1261, %v1303
        %v1324 = vadd.f32 %v1262, %v1305
        %v1325 = vadd.f32 %v1263, %v1308
        %v1326 = vadd.f32 %v1264, %v1310
        %s1327 = sld [smem:[#allocation4 + $0x10]]
        %v1328 = vstv %s1327
        %v1329 = vmul.f32 %v1328, %v925
        %v1330 = vmul.f32 %v1328, %v926
        %v1331 = vmul.f32 %v1328, %v927
        %v1332 = vmul.f32 %v1328, %v928
        %v1333 = vmul.f32 %v1328, %v929
        %v1334 = vmul.f32 %v1328, %v930
        %v1335 = vmul.f32 %v1328, %v931
        %v1336 = vmul.f32 %v1328, %v932
        %v1337 = vmul.f32 %v1328, %v933
        %v1338 = vmul.f32 %v1328, %v934
        %v1339 = vmul.f32 %v1328, %v935
        %v1340 = vmul.f32 %v1328, %v936
        %v1353 = vrot.slane %v1329, 2
        %v1354 = vrot.slane %v1330, 2
        %v1355 = vsel %vm692, %v1353, %v1354
        %v1356 = vrot.slane %v1331, 2
        %v1357 = vsel %vm692, %v1354, %v1356
        %v1358 = vrot.slane %v1332, 2
        %v1359 = vrot.slane %v1333, 2
        %v1360 = vsel %vm692, %v1358, %v1359
        %v1361 = vrot.slane %v1334, 2
        %v1362 = vsel %vm692, %v1359, %v1361
        %v1363 = vrot.slane %v1335, 2
        %v1364 = vrot.slane %v1336, 2
        %v1365 = vsel %vm692, %v1363, %v1364
        %v1366 = vrot.slane %v1337, 2
        %v1367 = vsel %vm692, %v1364, %v1366
        %v1368 = vrot.slane %v1338, 2
        %v1369 = vrot.slane %v1339, 2
        %v1370 = vsel %vm692, %v1368, %v1369
        %v1371 = vrot.slane %v1340, 2
        %v1372 = vsel %vm692, %v1369, %v1371
        %1373 = vrot.lane.b32.xlu0 %v1355, 127
        %v1374 = vpop.permute.xlu0 %1373
        %1375 = vrot.lane.b32.xlu0 %v1357, 127
        %v1376 = vpop.permute.xlu0 %1375
        %1377 = vrot.lane.b32.xlu0 %v1360, 127
        %v1378 = vpop.permute.xlu0 %1377
        %1379 = vrot.lane.b32.xlu0 %v1362, 127
        %v1380 = vpop.permute.xlu0 %1379
        %1381 = vrot.lane.b32.xlu0 %v1365, 127
        %v1382 = vpop.permute.xlu0 %1381
        %1383 = vrot.lane.b32.xlu0 %v1367, 127
        %v1384 = vpop.permute.xlu0 %1383
        %1385 = vrot.lane.b32.xlu0 %v1370, 127
        %v1386 = vpop.permute.xlu0 %1385
        %1387 = vrot.lane.b32.xlu0 %v1372, 127
        %v1388 = vpop.permute.xlu0 %1387
        %v1397 = vadd.f32 %v1319, %v1374
        %v1398 = vadd.f32 %v1320, %v1376
        %v1399 = vadd.f32 %v1321, %v1378
        %v1400 = vadd.f32 %v1322, %v1380
        %v1401 = vadd.f32 %v1323, %v1382
        %v1402 = vadd.f32 %v1324, %v1384
        %v1403 = vadd.f32 %v1325, %v1386
        %v1404 = vadd.f32 %v1326, %v1388
        %s1405 = sld [smem:[#allocation4 + $0x11]]
        %v1406 = vstv %s1405
        %v1407 = vmul.f32 %v1406, %v925
        %v1408 = vmul.f32 %v1406, %v926
        %v1409 = vmul.f32 %v1406, %v927
        %v1410 = vmul.f32 %v1406, %v928
        %v1411 = vmul.f32 %v1406, %v929
        %v1412 = vmul.f32 %v1406, %v930
        %v1413 = vmul.f32 %v1406, %v931
        %v1414 = vmul.f32 %v1406, %v932
        %v1415 = vmul.f32 %v1406, %v933
        %v1416 = vmul.f32 %v1406, %v934
        %v1417 = vmul.f32 %v1406, %v935
        %v1418 = vmul.f32 %v1406, %v936
        %v1431 = vrot.slane %v1407, 2
        %v1432 = vrot.slane %v1408, 2
        %v1433 = vsel %vm692, %v1431, %v1432
        %v1434 = vrot.slane %v1409, 2
        %v1435 = vsel %vm692, %v1432, %v1434
        %v1436 = vrot.slane %v1410, 2
        %v1437 = vrot.slane %v1411, 2
        %v1438 = vsel %vm692, %v1436, %v1437
        %v1439 = vrot.slane %v1412, 2
        %v1440 = vsel %vm692, %v1437, %v1439
        %v1441 = vrot.slane %v1413, 2
        %v1442 = vrot.slane %v1414, 2
        %v1443 = vsel %vm692, %v1441, %v1442
        %v1444 = vrot.slane %v1415, 2
        %v1445 = vsel %vm692, %v1442, %v1444
        %v1446 = vrot.slane %v1416, 2
        %v1447 = vrot.slane %v1417, 2
        %v1448 = vsel %vm692, %v1446, %v1447
        %v1449 = vrot.slane %v1418, 2
        %v1450 = vsel %vm692, %v1447, %v1449
        %1451 = vrot.lane.b32.xlu0 %v1433, 126
        %v1452 = vpop.permute.xlu0 %1451
        %1453 = vrot.lane.b32.xlu0 %v1435, 126
        %v1454 = vpop.permute.xlu0 %1453
        %1455 = vrot.lane.b32.xlu0 %v1438, 126
        %v1456 = vpop.permute.xlu0 %1455
        %1457 = vrot.lane.b32.xlu0 %v1440, 126
        %v1458 = vpop.permute.xlu0 %1457
        %1459 = vrot.lane.b32.xlu0 %v1443, 126
        %v1460 = vpop.permute.xlu0 %1459
        %1461 = vrot.lane.b32.xlu0 %v1445, 126
        %v1462 = vpop.permute.xlu0 %1461
        %1463 = vrot.lane.b32.xlu0 %v1448, 126
        %v1464 = vpop.permute.xlu0 %1463
        %1465 = vrot.lane.b32.xlu0 %v1450, 126
        %v1466 = vpop.permute.xlu0 %1465
        %v1475 = vadd.f32 %v1397, %v1452
        %v1476 = vadd.f32 %v1398, %v1454
        %v1477 = vadd.f32 %v1399, %v1456
        %v1478 = vadd.f32 %v1400, %v1458
        %v1479 = vadd.f32 %v1401, %v1460
        %v1480 = vadd.f32 %v1402, %v1462
        %v1481 = vadd.f32 %v1403, %v1464
        %v1482 = vadd.f32 %v1404, %v1466
        %v1483 = vrot.slane %v1479, 4
        %vm1484 = vcmask 1047556
        %v1485 = vsel %vm1484, %v1483, %v1475
        %v1486 = vrot.slane %v1475, 4
        %v1487 = vsel %vm1484, %v1479, %v1486
        %v1489 = vunpack.c.l.s4 1983009808
        %v1490 = vunpack.c.0.s8 %v1489
        %v1491 = vperm.slane %v1485, %v1490
        %v1493 = vunpack.c.l.s4 1983009808
        %v1494 = vunpack.c.0.s8 %v1493
        %v1495 = vperm.slane %v1487, %v1494
        %v1496 = vrot.slane %v1481, 4
        %v1497 = vsel %vm1484, %v1496, %v1477
        %v1498 = vrot.slane %v1477, 4
        %v1499 = vsel %vm1484, %v1481, %v1498
        %v1501 = vunpack.c.l.s4 1983009808
        %v1502 = vunpack.c.0.s8 %v1501
        %v1503 = vperm.slane %v1497, %v1502
        %v1505 = vunpack.c.l.s4 1983009808
        %v1506 = vunpack.c.0.s8 %v1505
        %v1507 = vperm.slane %v1499, %v1506
        %v1508 = vrot.slane %v1503, 4
        %v1509 = vsel %vm1484, %v1508, %v1491
        %v1510 = vrot.slane %v1491, 4
        %v1511 = vsel %vm1484, %v1503, %v1510
        %v1513 = vunpack.c.l.s4 1934713408
        %v1514 = vunpack.c.0.s8 %v1513
        %v1515 = vperm.slane %v1509, %v1514
        %v1517 = vunpack.c.l.s4 1934713408
        %v1518 = vunpack.c.0.s8 %v1517
        %v1519 = vperm.slane %v1511, %v1518
        %v1520 = vrot.slane %v1507, 4
        %v1521 = vsel %vm1484, %v1520, %v1495
        %v1522 = vrot.slane %v1495, 4
        %v1523 = vsel %vm1484, %v1507, %v1522
        %v1525 = vunpack.c.l.s4 1934713408
        %v1526 = vunpack.c.0.s8 %v1525
        %v1527 = vperm.slane %v1521, %v1526
        %v1529 = vunpack.c.l.s4 1934713408
        %v1530 = vunpack.c.0.s8 %v1529
        %v1531 = vperm.slane %v1523, %v1530
        %v1532 = vrot.slane %v1515, 4
        %v1533 = vsel %vm1484, 0.0, %v1532
        %v1534 = vrot.slane %v1519, 4
        %v1535 = vsel %vm1484, 0.0, %v1534
        %v1536 = vrot.slane %v1527, 4
        %v1537 = vsel %vm1484, 0.0, %v1536
        %v1538 = vrot.slane %v1531, 4
        %v1539 = vsel %vm1484, 0.0, %v1538
        %v1540 = vrot.slane %v1480, 4
        %v1541 = vsel %vm1484, %v1540, %v1476
        %v1542 = vrot.slane %v1476, 4
        %v1543 = vsel %vm1484, %v1480, %v1542
        %v1545 = vunpack.c.l.s4 1983009808
        %v1546 = vunpack.c.0.s8 %v1545
        %v1547 = vperm.slane %v1541, %v1546
        %v1549 = vunpack.c.l.s4 1983009808
        %v1550 = vunpack.c.0.s8 %v1549
        %v1551 = vperm.slane %v1543, %v1550
        %v1552 = vrot.slane %v1482, 4
        %v1553 = vsel %vm1484, %v1552, %v1478
        %v1554 = vrot.slane %v1478, 4
        %v1555 = vsel %vm1484, %v1482, %v1554
        %v1557 = vunpack.c.l.s4 1983009808
        %v1558 = vunpack.c.0.s8 %v1557
        %v1559 = vperm.slane %v1553, %v1558
        %v1561 = vunpack.c.l.s4 1983009808
        %v1562 = vunpack.c.0.s8 %v1561
        %v1563 = vperm.slane %v1555, %v1562
        %v1564 = vrot.slane %v1559, 4
        %v1565 = vsel %vm1484, %v1564, %v1547
        %v1566 = vrot.slane %v1547, 4
        %v1567 = vsel %vm1484, %v1559, %v1566
        %v1569 = vunpack.c.l.s4 1934713408
        %v1570 = vunpack.c.0.s8 %v1569
        %v1571 = vperm.slane %v1565, %v1570
        %v1573 = vunpack.c.l.s4 1934713408
        %v1574 = vunpack.c.0.s8 %v1573
        %v1575 = vperm.slane %v1567, %v1574
        %v1576 = vrot.slane %v1563, 4
        %v1577 = vsel %vm1484, %v1576, %v1551
        %v1578 = vrot.slane %v1551, 4
        %v1579 = vsel %vm1484, %v1563, %v1578
        %v1581 = vunpack.c.l.s4 1934713408
        %v1582 = vunpack.c.0.s8 %v1581
        %v1583 = vperm.slane %v1577, %v1582
        %v1585 = vunpack.c.l.s4 1934713408
        %v1586 = vunpack.c.0.s8 %v1585
        %v1587 = vperm.slane %v1579, %v1586
        %v1588 = vrot.slane %v1571, 4
        %v1589 = vsel %vm1484, 0.0, %v1588
        %v1590 = vrot.slane %v1575, 4
        %v1591 = vsel %vm1484, 0.0, %v1590
        %v1592 = vrot.slane %v1583, 4
        %v1593 = vsel %vm1484, 0.0, %v1592
        %v1594 = vrot.slane %v1587, 4
        %v1595 = vsel %vm1484, 0.0, %v1594
        %1597 = vrot.lane.b32.xlu0 %v1533, 16
        %v1598 = vpop.permute.xlu0 %1597
        %1601 = vrot.lane.b32.xlu0 %v1519, 32
        %v1602 = vpop.permute.xlu0 %1601
        %1605 = vrot.lane.b32.xlu0 %v1535, 48
        %v1606 = vpop.permute.xlu0 %1605
        %1609 = vrot.lane.b32.xlu0 %v1527, 64
        %v1610 = vpop.permute.xlu0 %1609
        %1613 = vrot.lane.b32.xlu0 %v1537, 80
        %v1614 = vpop.permute.xlu0 %1613
        %1617 = vrot.lane.b32.xlu0 %v1531, 96
        %v1618 = vpop.permute.xlu0 %1617
        %1621 = vrot.lane.b32.xlu0 %v1539, 112
        %v1622 = vpop.permute.xlu0 %1621
        %1625 = vrot.lane.b32.xlu0 %v1589, 16
        %v1626 = vpop.permute.xlu0 %1625
        %1629 = vrot.lane.b32.xlu0 %v1575, 32
        %v1630 = vpop.permute.xlu0 %1629
        %1633 = vrot.lane.b32.xlu0 %v1591, 48
        %v1634 = vpop.permute.xlu0 %1633
        %1637 = vrot.lane.b32.xlu0 %v1583, 64
        %v1638 = vpop.permute.xlu0 %1637
        %1641 = vrot.lane.b32.xlu0 %v1593, 80
        %v1642 = vpop.permute.xlu0 %1641
        %1645 = vrot.lane.b32.xlu0 %v1587, 96
        %v1646 = vpop.permute.xlu0 %1645
        %1649 = vrot.lane.b32.xlu0 %v1595, 112
        %v1650 = vpop.permute.xlu0 %1649
        %vm1652 = vcmask 130048
        %v1653 = vsel %vm1652, %v1515, %v1598
        %vm1654 = vcmask 261120
        %v1655 = vsel %vm1654, %v1653, %v1602
        %vm1656 = vcmask 392192
        %v1657 = vsel %vm1656, %v1655, %v1606
        %vm1658 = vcmask 523264
        %v1659 = vsel %vm1658, %v1657, %v1610
        %vm1660 = vcmask 654336
        %v1661 = vsel %vm1660, %v1659, %v1614
        %vm1662 = vcmask 785408
        %v1663 = vsel %vm1662, %v1661, %v1618
        %vm1664 = vcmask 916480
        %v1665 = vsel %vm1664, %v1663, %v1622
        %v1666 = vsel %vm1652, %v1571, %v1626
        %v1667 = vsel %vm1654, %v1666, %v1630
        %v1668 = vsel %vm1656, %v1667, %v1634
        %v1669 = vsel %vm1658, %v1668, %v1638
        %v1670 = vsel %vm1660, %v1669, %v1642
        %v1671 = vsel %vm1662, %v1670, %v1646
        %v1672 = vsel %vm1664, %v1671, %v1650
        %vm1673 = vcmask 1043456
        %v1674 = vsel %vm1673, %v1665, 0.0
        %v1675 = vsel %vm1673, %v1672, 0.0
        %v1676 = vadd.f32 %v1674, %v1675
        %1677 = vadd.xlane.f32.xlu0 %v1676
        %v1678 = vpop.xlane.xlu0 %1677
        %v1679 = vmul.f32 %v1665, %v1665
        %v1680 = vmul.f32 %v1672, %v1672
        %v1681 = vsel %vm1673, %v1679, 0.0
        %v1682 = vsel %vm1673, %v1680, 0.0
        %v1683 = vadd.f32 %v1681, %v1682
        %1684 = vadd.xlane.f32.xlu0 %v1683
        %v1685 = vpop.xlane.xlu0 %1684
        %v1686 = vmul.f32 %v1678, 0.00390625
        %v1687 = vmul.f32 %v1685, 0.00390625
        %v1688 = vmul.f32 %v1686, %v1686
        %v1689 = vsub.f32 %v1687, %v1688
        %v1691 = vlaneseq
        %v1692 = vand.u32 %v1691, 127
        %v1693 = vperm.slane %v1686, %v1692
        %vm1695 = vcmask 24576
        %1696 = vst.msk [vmem:[%s235] sm:$0x1] %vm1695, %v1693
        %v1698 = vperm.slane %v1689, %v1692
        %1700 = vst.msk [vmem:[%s242] sm:$0x1] %vm1695, %v1698
        %s1701 = sld [smem:[#allocation4 + $0x12]]
        %v1702 = vstv %s1701
        %v1703 = vmul.f32 %v1702, %v925
        %v1704 = vmul.f32 %v1702, %v926
        %v1705 = vmul.f32 %v1702, %v928
        %v1706 = vmul.f32 %v1702, %v929
        %v1707 = vmul.f32 %v1702, %v931
        %v1708 = vmul.f32 %v1702, %v932
        %v1709 = vmul.f32 %v1702, %v934
        %v1710 = vmul.f32 %v1702, %v935
        %s1711 = sld [smem:[#allocation4 + $0x13]]
        %v1712 = vstv %s1711
        %v1713 = vmul.f32 %v1712, %v925
        %v1714 = vmul.f32 %v1712, %v926
        %v1715 = vmul.f32 %v1712, %v928
        %v1716 = vmul.f32 %v1712, %v929
        %v1717 = vmul.f32 %v1712, %v931
        %v1718 = vmul.f32 %v1712, %v932
        %v1719 = vmul.f32 %v1712, %v934
        %v1720 = vmul.f32 %v1712, %v935
        %1729 = vrot.lane.b32.xlu0 %v1713, 127
        %v1730 = vpop.permute.xlu0 %1729
        %1731 = vrot.lane.b32.xlu0 %v1714, 127
        %v1732 = vpop.permute.xlu0 %1731
        %1733 = vrot.lane.b32.xlu0 %v1715, 127
        %v1734 = vpop.permute.xlu0 %1733
        %1735 = vrot.lane.b32.xlu0 %v1716, 127
        %v1736 = vpop.permute.xlu0 %1735
        %1737 = vrot.lane.b32.xlu0 %v1717, 127
        %v1738 = vpop.permute.xlu0 %1737
        %1739 = vrot.lane.b32.xlu0 %v1718, 127
        %v1740 = vpop.permute.xlu0 %1739
        %1741 = vrot.lane.b32.xlu0 %v1719, 127
        %v1742 = vpop.permute.xlu0 %1741
        %1743 = vrot.lane.b32.xlu0 %v1720, 127
        %v1744 = vpop.permute.xlu0 %1743
        %v1753 = vadd.f32 %v1703, %v1730
        %v1754 = vadd.f32 %v1704, %v1732
        %v1755 = vadd.f32 %v1705, %v1734
        %v1756 = vadd.f32 %v1706, %v1736
        %v1757 = vadd.f32 %v1707, %v1738
        %v1758 = vadd.f32 %v1708, %v1740
        %v1759 = vadd.f32 %v1709, %v1742
        %v1760 = vadd.f32 %v1710, %v1744
        %s1761 = sld [smem:[#allocation4 + $0x14]]
        %v1762 = vstv %s1761
        %v1763 = vmul.f32 %v1762, %v925
        %v1764 = vmul.f32 %v1762, %v926
        %v1765 = vmul.f32 %v1762, %v928
        %v1766 = vmul.f32 %v1762, %v929
        %v1767 = vmul.f32 %v1762, %v931
        %v1768 = vmul.f32 %v1762, %v932
        %v1769 = vmul.f32 %v1762, %v934
        %v1770 = vmul.f32 %v1762, %v935
        %1779 = vrot.lane.b32.xlu0 %v1763, 126
        %v1780 = vpop.permute.xlu0 %1779
        %1781 = vrot.lane.b32.xlu0 %v1764, 126
        %v1782 = vpop.permute.xlu0 %1781
        %1783 = vrot.lane.b32.xlu0 %v1765, 126
        %v1784 = vpop.permute.xlu0 %1783
        %1785 = vrot.lane.b32.xlu0 %v1766, 126
        %v1786 = vpop.permute.xlu0 %1785
        %1787 = vrot.lane.b32.xlu0 %v1767, 126
        %v1788 = vpop.permute.xlu0 %1787
        %1789 = vrot.lane.b32.xlu0 %v1768, 126
        %v1790 = vpop.permute.xlu0 %1789
        %1791 = vrot.lane.b32.xlu0 %v1769, 126
        %v1792 = vpop.permute.xlu0 %1791
        %1793 = vrot.lane.b32.xlu0 %v1770, 126
        %v1794 = vpop.permute.xlu0 %1793
        %v1803 = vadd.f32 %v1753, %v1780
        %v1804 = vadd.f32 %v1754, %v1782
        %v1805 = vadd.f32 %v1755, %v1784
        %v1806 = vadd.f32 %v1756, %v1786
        %v1807 = vadd.f32 %v1757, %v1788
        %v1808 = vadd.f32 %v1758, %v1790
        %v1809 = vadd.f32 %v1759, %v1792
        %v1810 = vadd.f32 %v1760, %v1794
        %s1811 = sld [smem:[#allocation4 + $0x15]]
        %v1812 = vstv %s1811
        %v1813 = vmul.f32 %v1812, %v925
        %v1814 = vmul.f32 %v1812, %v926
        %v1815 = vmul.f32 %v1812, %v927
        %v1816 = vmul.f32 %v1812, %v928
        %v1817 = vmul.f32 %v1812, %v929
        %v1818 = vmul.f32 %v1812, %v930
        %v1819 = vmul.f32 %v1812, %v931
        %v1820 = vmul.f32 %v1812, %v932
        %v1821 = vmul.f32 %v1812, %v933
        %v1822 = vmul.f32 %v1812, %v934
        %v1823 = vmul.f32 %v1812, %v935
        %v1824 = vmul.f32 %v1812, %v936
        %v1837 = vrot.slane %v1813, 1
        %v1838 = vrot.slane %v1814, 1
        %v1839 = vsel %vm473, %v1837, %v1838
        %v1840 = vrot.slane %v1815, 1
        %v1841 = vsel %vm473, %v1838, %v1840
        %v1842 = vrot.slane %v1816, 1
        %v1843 = vrot.slane %v1817, 1
        %v1844 = vsel %vm473, %v1842, %v1843
        %v1845 = vrot.slane %v1818, 1
        %v1846 = vsel %vm473, %v1843, %v1845
        %v1847 = vrot.slane %v1819, 1
        %v1848 = vrot.slane %v1820, 1
        %v1849 = vsel %vm473, %v1847, %v1848
        %v1850 = vrot.slane %v1821, 1
        %v1851 = vsel %vm473, %v1848, %v1850
        %v1852 = vrot.slane %v1822, 1
        %v1853 = vrot.slane %v1823, 1
        %v1854 = vsel %vm473, %v1852, %v1853
        %v1855 = vrot.slane %v1824, 1
        %v1856 = vsel %vm473, %v1853, %v1855
        %v1865 = vadd.f32 %v1803, %v1839
        %v1866 = vadd.f32 %v1804, %v1841
        %v1867 = vadd.f32 %v1805, %v1844
        %v1868 = vadd.f32 %v1806, %v1846
        %v1869 = vadd.f32 %v1807, %v1849
        %v1870 = vadd.f32 %v1808, %v1851
        %v1871 = vadd.f32 %v1809, %v1854
        %v1872 = vadd.f32 %v1810, %v1856
        %s1873 = sld [smem:[#allocation4 + $0x16]]
        %v1874 = vstv %s1873
        %v1875 = vmul.f32 %v1874, %v925
        %v1876 = vmul.f32 %v1874, %v926
        %v1877 = vmul.f32 %v1874, %v927
        %v1878 = vmul.f32 %v1874, %v928
        %v1879 = vmul.f32 %v1874, %v929
        %v1880 = vmul.f32 %v1874, %v930
        %v1881 = vmul.f32 %v1874, %v931
        %v1882 = vmul.f32 %v1874, %v932
        %v1883 = vmul.f32 %v1874, %v933
        %v1884 = vmul.f32 %v1874, %v934
        %v1885 = vmul.f32 %v1874, %v935
        %v1886 = vmul.f32 %v1874, %v936
        %v1899 = vrot.slane %v1875, 1
        %v1900 = vrot.slane %v1876, 1
        %v1901 = vsel %vm473, %v1899, %v1900
        %v1902 = vrot.slane %v1877, 1
        %v1903 = vsel %vm473, %v1900, %v1902
        %v1904 = vrot.slane %v1878, 1
        %v1905 = vrot.slane %v1879, 1
        %v1906 = vsel %vm473, %v1904, %v1905
        %v1907 = vrot.slane %v1880, 1
        %v1908 = vsel %vm473, %v1905, %v1907
        %v1909 = vrot.slane %v1881, 1
        %v1910 = vrot.slane %v1882, 1
        %v1911 = vsel %vm473, %v1909, %v1910
        %v1912 = vrot.slane %v1883, 1
        %v1913 = vsel %vm473, %v1910, %v1912
        %v1914 = vrot.slane %v1884, 1
        %v1915 = vrot.slane %v1885, 1
        %v1916 = vsel %vm473, %v1914, %v1915
        %v1917 = vrot.slane %v1886, 1
        %v1918 = vsel %vm473, %v1915, %v1917
        %1919 = vrot.lane.b32.xlu0 %v1901, 127
        %v1920 = vpop.permute.xlu0 %1919
        %1921 = vrot.lane.b32.xlu0 %v1903, 127
        %v1922 = vpop.permute.xlu0 %1921
        %1923 = vrot.lane.b32.xlu0 %v1906, 127
        %v1924 = vpop.permute.xlu0 %1923
        %1925 = vrot.lane.b32.xlu0 %v1908, 127
        %v1926 = vpop.permute.xlu0 %1925
        %1927 = vrot.lane.b32.xlu0 %v1911, 127
        %v1928 = vpop.permute.xlu0 %1927
        %1929 = vrot.lane.b32.xlu0 %v1913, 127
        %v1930 = vpop.permute.xlu0 %1929
        %1931 = vrot.lane.b32.xlu0 %v1916, 127
        %v1932 = vpop.permute.xlu0 %1931
        %1933 = vrot.lane.b32.xlu0 %v1918, 127
        %v1934 = vpop.permute.xlu0 %1933
        %v1943 = vadd.f32 %v1865, %v1920
        %v1944 = vadd.f32 %v1866, %v1922
        %v1945 = vadd.f32 %v1867, %v1924
        %v1946 = vadd.f32 %v1868, %v1926
        %v1947 = vadd.f32 %v1869, %v1928
        %v1948 = vadd.f32 %v1870, %v1930
        %v1949 = vadd.f32 %v1871, %v1932
        %v1950 = vadd.f32 %v1872, %v1934
        %s1951 = sld [smem:[#allocation4 + $0x17]]
        %v1952 = vstv %s1951
        %v1953 = vmul.f32 %v1952, %v925
        %v1954 = vmul.f32 %v1952, %v926
        %v1955 = vmul.f32 %v1952, %v927
        %v1956 = vmul.f32 %v1952, %v928
        %v1957 = vmul.f32 %v1952, %v929
        %v1958 = vmul.f32 %v1952, %v930
        %v1959 = vmul.f32 %v1952, %v931
        %v1960 = vmul.f32 %v1952, %v932
        %v1961 = vmul.f32 %v1952, %v933
        %v1962 = vmul.f32 %v1952, %v934
        %v1963 = vmul.f32 %v1952, %v935
        %v1964 = vmul.f32 %v1952, %v936
        %v1977 = vrot.slane %v1953, 1
        %v1978 = vrot.slane %v1954, 1
        %v1979 = vsel %vm473, %v1977, %v1978
        %v1980 = vrot.slane %v1955, 1
        %v1981 = vsel %vm473, %v1978, %v1980
        %v1982 = vrot.slane %v1956, 1
        %v1983 = vrot.slane %v1957, 1
        %v1984 = vsel %vm473, %v1982, %v1983
        %v1985 = vrot.slane %v1958, 1
        %v1986 = vsel %vm473, %v1983, %v1985
        %v1987 = vrot.slane %v1959, 1
        %v1988 = vrot.slane %v1960, 1
        %v1989 = vsel %vm473, %v1987, %v1988
        %v1990 = vrot.slane %v1961, 1
        %v1991 = vsel %vm473, %v1988, %v1990
        %v1992 = vrot.slane %v1962, 1
        %v1993 = vrot.slane %v1963, 1
        %v1994 = vsel %vm473, %v1992, %v1993
        %v1995 = vrot.slane %v1964, 1
        %v1996 = vsel %vm473, %v1993, %v1995
        %1997 = vrot.lane.b32.xlu0 %v1979, 126
        %v1998 = vpop.permute.xlu0 %1997
        %1999 = vrot.lane.b32.xlu0 %v1981, 126
        %v2000 = vpop.permute.xlu0 %1999
        %2001 = vrot.lane.b32.xlu0 %v1984, 126
        %v2002 = vpop.permute.xlu0 %2001
        %2003 = vrot.lane.b32.xlu0 %v1986, 126
        %v2004 = vpop.permute.xlu0 %2003
        %2005 = vrot.lane.b32.xlu0 %v1989, 126
        %v2006 = vpop.permute.xlu0 %2005
        %2007 = vrot.lane.b32.xlu0 %v1991, 126
        %v2008 = vpop.permute.xlu0 %2007
        %2009 = vrot.lane.b32.xlu0 %v1994, 126
        %v2010 = vpop.permute.xlu0 %2009
        %2011 = vrot.lane.b32.xlu0 %v1996, 126
        %v2012 = vpop.permute.xlu0 %2011
        %v2021 = vadd.f32 %v1943, %v1998
        %v2022 = vadd.f32 %v1944, %v2000
        %v2023 = vadd.f32 %v1945, %v2002
        %v2024 = vadd.f32 %v1946, %v2004
        %v2025 = vadd.f32 %v1947, %v2006
        %v2026 = vadd.f32 %v1948, %v2008
        %v2027 = vadd.f32 %v1949, %v2010
        %v2028 = vadd.f32 %v1950, %v2012
        %s2029 = sld [smem:[#allocation4 + $0x18]]
        %v2030 = vstv %s2029
        %v2031 = vmul.f32 %v2030, %v925
        %v2032 = vmul.f32 %v2030, %v926
        %v2033 = vmul.f32 %v2030, %v927
        %v2034 = vmul.f32 %v2030, %v928
        %v2035 = vmul.f32 %v2030, %v929
        %v2036 = vmul.f32 %v2030, %v930
        %v2037 = vmul.f32 %v2030, %v931
        %v2038 = vmul.f32 %v2030, %v932
        %v2039 = vmul.f32 %v2030, %v933
        %v2040 = vmul.f32 %v2030, %v934
        %v2041 = vmul.f32 %v2030, %v935
        %v2042 = vmul.f32 %v2030, %v936
        %v2055 = vrot.slane %v2031, 2
        %v2056 = vrot.slane %v2032, 2
        %v2057 = vsel %vm692, %v2055, %v2056
        %v2058 = vrot.slane %v2033, 2
        %v2059 = vsel %vm692, %v2056, %v2058
        %v2060 = vrot.slane %v2034, 2
        %v2061 = vrot.slane %v2035, 2
        %v2062 = vsel %vm692, %v2060, %v2061
        %v2063 = vrot.slane %v2036, 2
        %v2064 = vsel %vm692, %v2061, %v2063
        %v2065 = vrot.slane %v2037, 2
        %v2066 = vrot.slane %v2038, 2
        %v2067 = vsel %vm692, %v2065, %v2066
        %v2068 = vrot.slane %v2039, 2
        %v2069 = vsel %vm692, %v2066, %v2068
        %v2070 = vrot.slane %v2040, 2
        %v2071 = vrot.slane %v2041, 2
        %v2072 = vsel %vm692, %v2070, %v2071
        %v2073 = vrot.slane %v2042, 2
        %v2074 = vsel %vm692, %v2071, %v2073
        %v2083 = vadd.f32 %v2021, %v2057
        %v2084 = vadd.f32 %v2022, %v2059
        %v2085 = vadd.f32 %v2023, %v2062
        %v2086 = vadd.f32 %v2024, %v2064
        %v2087 = vadd.f32 %v2025, %v2067
        %v2088 = vadd.f32 %v2026, %v2069
        %v2089 = vadd.f32 %v2027, %v2072
        %v2090 = vadd.f32 %v2028, %v2074
        %s2091 = sld [smem:[#allocation4 + $0x19]]
        %v2092 = vstv %s2091
        %v2093 = vmul.f32 %v2092, %v925
        %v2094 = vmul.f32 %v2092, %v926
        %v2095 = vmul.f32 %v2092, %v927
        %v2096 = vmul.f32 %v2092, %v928
        %v2097 = vmul.f32 %v2092, %v929
        %v2098 = vmul.f32 %v2092, %v930
        %v2099 = vmul.f32 %v2092, %v931
        %v2100 = vmul.f32 %v2092, %v932
        %v2101 = vmul.f32 %v2092, %v933
        %v2102 = vmul.f32 %v2092, %v934
        %v2103 = vmul.f32 %v2092, %v935
        %v2104 = vmul.f32 %v2092, %v936
        %v2117 = vrot.slane %v2093, 2
        %v2118 = vrot.slane %v2094, 2
        %v2119 = vsel %vm692, %v2117, %v2118
        %v2120 = vrot.slane %v2095, 2
        %v2121 = vsel %vm692, %v2118, %v2120
        %v2122 = vrot.slane %v2096, 2
        %v2123 = vrot.slane %v2097, 2
        %v2124 = vsel %vm692, %v2122, %v2123
        %v2125 = vrot.slane %v2098, 2
        %v2126 = vsel %vm692, %v2123, %v2125
        %v2127 = vrot.slane %v2099, 2
        %v2128 = vrot.slane %v2100, 2
        %v2129 = vsel %vm692, %v2127, %v2128
        %v2130 = vrot.slane %v2101, 2
        %v2131 = vsel %vm692, %v2128, %v2130
        %v2132 = vrot.slane %v2102, 2
        %v2133 = vrot.slane %v2103, 2
        %v2134 = vsel %vm692, %v2132, %v2133
        %v2135 = vrot.slane %v2104, 2
        %v2136 = vsel %vm692, %v2133, %v2135
        %2137 = vrot.lane.b32.xlu0 %v2119, 127
        %v2138 = vpop.permute.xlu0 %2137
        %2139 = vrot.lane.b32.xlu0 %v2121, 127
        %v2140 = vpop.permute.xlu0 %2139
        %2141 = vrot.lane.b32.xlu0 %v2124, 127
        %v2142 = vpop.permute.xlu0 %2141
        %2143 = vrot.lane.b32.xlu0 %v2126, 127
        %v2144 = vpop.permute.xlu0 %2143
        %2145 = vrot.lane.b32.xlu0 %v2129, 127
        %v2146 = vpop.permute.xlu0 %2145
        %2147 = vrot.lane.b32.xlu0 %v2131, 127
        %v2148 = vpop.permute.xlu0 %2147
        %2149 = vrot.lane.b32.xlu0 %v2134, 127
        %v2150 = vpop.permute.xlu0 %2149
        %2151 = vrot.lane.b32.xlu0 %v2136, 127
        %v2152 = vpop.permute.xlu0 %2151
        %v2161 = vadd.f32 %v2083, %v2138
        %v2162 = vadd.f32 %v2084, %v2140
        %v2163 = vadd.f32 %v2085, %v2142
        %v2164 = vadd.f32 %v2086, %v2144
        %v2165 = vadd.f32 %v2087, %v2146
        %v2166 = vadd.f32 %v2088, %v2148
        %v2167 = vadd.f32 %v2089, %v2150
        %v2168 = vadd.f32 %v2090, %v2152
        %s2169 = sld [smem:[#allocation4 + $0x1a]]
        %v2170 = vstv %s2169
        %v2171 = vmul.f32 %v2170, %v925
        %v2172 = vmul.f32 %v2170, %v926
        %v2173 = vmul.f32 %v2170, %v927
        %v2174 = vmul.f32 %v2170, %v928
        %v2175 = vmul.f32 %v2170, %v929
        %v2176 = vmul.f32 %v2170, %v930
        %v2177 = vmul.f32 %v2170, %v931
        %v2178 = vmul.f32 %v2170, %v932
        %v2179 = vmul.f32 %v2170, %v933
        %v2180 = vmul.f32 %v2170, %v934
        %v2181 = vmul.f32 %v2170, %v935
        %v2182 = vmul.f32 %v2170, %v936
        %v2195 = vrot.slane %v2171, 2
        %v2196 = vrot.slane %v2172, 2
        %v2197 = vsel %vm692, %v2195, %v2196
        %v2198 = vrot.slane %v2173, 2
        %v2199 = vsel %vm692, %v2196, %v2198
        %v2200 = vrot.slane %v2174, 2
        %v2201 = vrot.slane %v2175, 2
        %v2202 = vsel %vm692, %v2200, %v2201
        %v2203 = vrot.slane %v2176, 2
        %v2204 = vsel %vm692, %v2201, %v2203
        %v2205 = vrot.slane %v2177, 2
        %v2206 = vrot.slane %v2178, 2
        %v2207 = vsel %vm692, %v2205, %v2206
        %v2208 = vrot.slane %v2179, 2
        %v2209 = vsel %vm692, %v2206, %v2208
        %v2210 = vrot.slane %v2180, 2
        %v2211 = vrot.slane %v2181, 2
        %v2212 = vsel %vm692, %v2210, %v2211
        %v2213 = vrot.slane %v2182, 2
        %v2214 = vsel %vm692, %v2211, %v2213
        %2215 = vrot.lane.b32.xlu0 %v2197, 126
        %v2216 = vpop.permute.xlu0 %2215
        %2217 = vrot.lane.b32.xlu0 %v2199, 126
        %v2218 = vpop.permute.xlu0 %2217
        %2219 = vrot.lane.b32.xlu0 %v2202, 126
        %v2220 = vpop.permute.xlu0 %2219
        %2221 = vrot.lane.b32.xlu0 %v2204, 126
        %v2222 = vpop.permute.xlu0 %2221
        %2223 = vrot.lane.b32.xlu0 %v2207, 126
        %v2224 = vpop.permute.xlu0 %2223
        %2225 = vrot.lane.b32.xlu0 %v2209, 126
        %v2226 = vpop.permute.xlu0 %2225
        %2227 = vrot.lane.b32.xlu0 %v2212, 126
        %v2228 = vpop.permute.xlu0 %2227
        %2229 = vrot.lane.b32.xlu0 %v2214, 126
        %v2230 = vpop.permute.xlu0 %2229
        %v2239 = vadd.f32 %v2161, %v2216
        %v2240 = vadd.f32 %v2162, %v2218
        %v2241 = vadd.f32 %v2163, %v2220
        %v2242 = vadd.f32 %v2164, %v2222
        %v2243 = vadd.f32 %v2165, %v2224
        %v2244 = vadd.f32 %v2166, %v2226
        %v2245 = vadd.f32 %v2167, %v2228
        %v2246 = vadd.f32 %v2168, %v2230
        %v2247 = vrot.slane %v2243, 4
        %v2248 = vsel %vm1484, %v2247, %v2239
        %v2249 = vrot.slane %v2239, 4
        %v2250 = vsel %vm1484, %v2243, %v2249
        %v2252 = vunpack.c.l.s4 1983009808
        %v2253 = vunpack.c.0.s8 %v2252
        %v2254 = vperm.slane %v2248, %v2253
        %v2256 = vunpack.c.l.s4 1983009808
        %v2257 = vunpack.c.0.s8 %v2256
        %v2258 = vperm.slane %v2250, %v2257
        %v2259 = vrot.slane %v2245, 4
        %v2260 = vsel %vm1484, %v2259, %v2241
        %v2261 = vrot.slane %v2241, 4
        %v2262 = vsel %vm1484, %v2245, %v2261
        %v2264 = vunpack.c.l.s4 1983009808
        %v2265 = vunpack.c.0.s8 %v2264
        %v2266 = vperm.slane %v2260, %v2265
        %v2268 = vunpack.c.l.s4 1983009808
        %v2269 = vunpack.c.0.s8 %v2268
        %v2270 = vperm.slane %v2262, %v2269
        %v2271 = vrot.slane %v2266, 4
        %v2272 = vsel %vm1484, %v2271, %v2254
        %v2273 = vrot.slane %v2254, 4
        %v2274 = vsel %vm1484, %v2266, %v2273
        %v2276 = vunpack.c.l.s4 1934713408
        %v2277 = vunpack.c.0.s8 %v2276
        %v2278 = vperm.slane %v2272, %v2277
        %v2280 = vunpack.c.l.s4 1934713408
        %v2281 = vunpack.c.0.s8 %v2280
        %v2282 = vperm.slane %v2274, %v2281
        %v2283 = vrot.slane %v2270, 4
        %v2284 = vsel %vm1484, %v2283, %v2258
        %v2285 = vrot.slane %v2258, 4
        %v2286 = vsel %vm1484, %v2270, %v2285
        %v2288 = vunpack.c.l.s4 1934713408
        %v2289 = vunpack.c.0.s8 %v2288
        %v2290 = vperm.slane %v2284, %v2289
        %v2292 = vunpack.c.l.s4 1934713408
        %v2293 = vunpack.c.0.s8 %v2292
        %v2294 = vperm.slane %v2286, %v2293
        %v2295 = vrot.slane %v2278, 4
        %v2296 = vsel %vm1484, 0.0, %v2295
        %v2297 = vrot.slane %v2282, 4
        %v2298 = vsel %vm1484, 0.0, %v2297
        %v2299 = vrot.slane %v2290, 4
        %v2300 = vsel %vm1484, 0.0, %v2299
        %v2301 = vrot.slane %v2294, 4
        %v2302 = vsel %vm1484, 0.0, %v2301
        %v2303 = vrot.slane %v2244, 4
        %v2304 = vsel %vm1484, %v2303, %v2240
        %v2305 = vrot.slane %v2240, 4
        %v2306 = vsel %vm1484, %v2244, %v2305
        %v2308 = vunpack.c.l.s4 1983009808
        %v2309 = vunpack.c.0.s8 %v2308
        %v2310 = vperm.slane %v2304, %v2309
        %v2312 = vunpack.c.l.s4 1983009808
        %v2313 = vunpack.c.0.s8 %v2312
        %v2314 = vperm.slane %v2306, %v2313
        %v2315 = vrot.slane %v2246, 4
        %v2316 = vsel %vm1484, %v2315, %v2242
        %v2317 = vrot.slane %v2242, 4
        %v2318 = vsel %vm1484, %v2246, %v2317
        %v2320 = vunpack.c.l.s4 1983009808
        %v2321 = vunpack.c.0.s8 %v2320
        %v2322 = vperm.slane %v2316, %v2321
        %v2324 = vunpack.c.l.s4 1983009808
        %v2325 = vunpack.c.0.s8 %v2324
        %v2326 = vperm.slane %v2318, %v2325
        %v2327 = vrot.slane %v2322, 4
        %v2328 = vsel %vm1484, %v2327, %v2310
        %v2329 = vrot.slane %v2310, 4
        %v2330 = vsel %vm1484, %v2322, %v2329
        %v2332 = vunpack.c.l.s4 1934713408
        %v2333 = vunpack.c.0.s8 %v2332
        %v2334 = vperm.slane %v2328, %v2333
        %v2336 = vunpack.c.l.s4 1934713408
        %v2337 = vunpack.c.0.s8 %v2336
        %v2338 = vperm.slane %v2330, %v2337
        %v2339 = vrot.slane %v2326, 4
        %v2340 = vsel %vm1484, %v2339, %v2314
        %v2341 = vrot.slane %v2314, 4
        %v2342 = vsel %vm1484, %v2326, %v2341
        %v2344 = vunpack.c.l.s4 1934713408
        %v2345 = vunpack.c.0.s8 %v2344
        %v2346 = vperm.slane %v2340, %v2345
        %v2348 = vunpack.c.l.s4 1934713408
        %v2349 = vunpack.c.0.s8 %v2348
        %v2350 = vperm.slane %v2342, %v2349
        %v2351 = vrot.slane %v2334, 4
        %v2352 = vsel %vm1484, 0.0, %v2351
        %v2353 = vrot.slane %v2338, 4
        %v2354 = vsel %vm1484, 0.0, %v2353
        %v2355 = vrot.slane %v2346, 4
        %v2356 = vsel %vm1484, 0.0, %v2355
        %v2357 = vrot.slane %v2350, 4
        %v2358 = vsel %vm1484, 0.0, %v2357
        %2360 = vrot.lane.b32.xlu0 %v2296, 16
        %v2361 = vpop.permute.xlu0 %2360
        %2364 = vrot.lane.b32.xlu0 %v2282, 32
        %v2365 = vpop.permute.xlu0 %2364
        %2368 = vrot.lane.b32.xlu0 %v2298, 48
        %v2369 = vpop.permute.xlu0 %2368
        %2372 = vrot.lane.b32.xlu0 %v2290, 64
        %v2373 = vpop.permute.xlu0 %2372
        %2376 = vrot.lane.b32.xlu0 %v2300, 80
        %v2377 = vpop.permute.xlu0 %2376
        %2380 = vrot.lane.b32.xlu0 %v2294, 96
        %v2381 = vpop.permute.xlu0 %2380
        %2384 = vrot.lane.b32.xlu0 %v2302, 112
        %v2385 = vpop.permute.xlu0 %2384
        %2388 = vrot.lane.b32.xlu0 %v2352, 16
        %v2389 = vpop.permute.xlu0 %2388
        %2392 = vrot.lane.b32.xlu0 %v2338, 32
        %v2393 = vpop.permute.xlu0 %2392
        %2396 = vrot.lane.b32.xlu0 %v2354, 48
        %v2397 = vpop.permute.xlu0 %2396
        %2400 = vrot.lane.b32.xlu0 %v2346, 64
        %v2401 = vpop.permute.xlu0 %2400
        %2404 = vrot.lane.b32.xlu0 %v2356, 80
        %v2405 = vpop.permute.xlu0 %2404
        %2408 = vrot.lane.b32.xlu0 %v2350, 96
        %v2409 = vpop.permute.xlu0 %2408
        %2412 = vrot.lane.b32.xlu0 %v2358, 112
        %v2413 = vpop.permute.xlu0 %2412
        %v2415 = vsel %vm1652, %v2278, %v2361
        %v2416 = vsel %vm1654, %v2415, %v2365
        %v2417 = vsel %vm1656, %v2416, %v2369
        %v2418 = vsel %vm1658, %v2417, %v2373
        %v2419 = vsel %vm1660, %v2418, %v2377
        %v2420 = vsel %vm1662, %v2419, %v2381
        %v2421 = vsel %vm1664, %v2420, %v2385
        %v2422 = vsel %vm1652, %v2334, %v2389
        %v2423 = vsel %vm1654, %v2422, %v2393
        %v2424 = vsel %vm1656, %v2423, %v2397
        %v2425 = vsel %vm1658, %v2424, %v2401
        %v2426 = vsel %vm1660, %v2425, %v2405
        %v2427 = vsel %vm1662, %v2426, %v2409
        %v2428 = vsel %vm1664, %v2427, %v2413
        %v2429 = vsel %vm1673, %v2421, 0.0
        %v2430 = vsel %vm1673, %v2428, 0.0
        %v2431 = vadd.f32 %v2429, %v2430
        %2432 = vadd.xlane.f32.xlu0 %v2431
        %v2433 = vpop.xlane.xlu0 %2432
        %v2434 = vmul.f32 %v2421, %v2421
        %v2435 = vmul.f32 %v2428, %v2428
        %v2436 = vsel %vm1673, %v2434, 0.0
        %v2437 = vsel %vm1673, %v2435, 0.0
        %v2438 = vadd.f32 %v2436, %v2437
        %2439 = vadd.xlane.f32.xlu0 %v2438
        %v2440 = vpop.xlane.xlu0 %2439
        %v2441 = vmul.f32 %v2433, 0.00390625
        %v2442 = vmul.f32 %v2440, 0.00390625
        %v2443 = vmul.f32 %v2441, %v2441
        %v2444 = vsub.f32 %v2442, %v2443
        %v2446 = vperm.slane %v2441, %v1692
        %2448 = vst.msk [vmem:[%s235 + $0x1] sm:$0x1] %vm1695, %v2446
        %v2450 = vperm.slane %v2444, %v1692
        %2452 = vst.msk [vmem:[%s242 + $0x1] sm:$0x1] %vm1695, %v2450
        %2453 = vmatpush.xpose.msra.mxu0 0.0
        %2454 = vmatpush.xpose.msra.mxu0 0.0
        %2455 = vmatpush.xpose.msra.mxu0 0.0
        %2456 = vmatpush.xpose.msra.mxu0 0.0
        %2457 = vmatpush.xpose.msra.mxu0 0.0
        %2458 = vmatpush.xpose.msra.mxu0 0.0
        %2459 = vmatpush.xpose.msra.mxu0 0.0
        %2460 = vmatpush.xpose.msra.mxu0 0.0
        %2461 = vmatpush.xpose.msra.mxu0 0.0
        %2462 = vmatpush.xpose.msra.mxu0 0.0
        %2463 = vmatpush.xpose.msra.mxu0 0.0
        %2464 = vmatpush.xpose.msra.mxu0 0.0
        %2465 = vmatpush.xpose.msra.mxu0 0.0
        %2466 = vmatpush.xpose.msra.mxu0 0.0
        %2467 = vmatpush.xpose.msra.mxu0 0.0
        %2468 = vmatpush.xpose.msra.mxu0 %v2421
        %2469 = vmatmul.f32.gmra.mxu0 %v1665
        %v2470 = vpop.f32.mrf.mxu0
        %v2471 = vadd.f32 0.0, %v2470
        %2472 = vdwg.mxu0
        %2473 = vmatpush.xpose.msra.mxu0 0.0
        %2474 = vmatpush.xpose.msra.mxu0 0.0
        %2475 = vmatpush.xpose.msra.mxu0 0.0
        %2476 = vmatpush.xpose.msra.mxu0 0.0
        %2477 = vmatpush.xpose.msra.mxu0 0.0
        %2478 = vmatpush.xpose.msra.mxu0 0.0
        %2479 = vmatpush.xpose.msra.mxu0 0.0
        %2480 = vmatpush.xpose.msra.mxu0 0.0
        %2481 = vmatpush.xpose.msra.mxu0 0.0
        %2482 = vmatpush.xpose.msra.mxu0 0.0
        %2483 = vmatpush.xpose.msra.mxu0 0.0
        %2484 = vmatpush.xpose.msra.mxu0 0.0
        %2485 = vmatpush.xpose.msra.mxu0 0.0
        %2486 = vmatpush.xpose.msra.mxu0 0.0
        %2487 = vmatpush.xpose.msra.mxu0 0.0
        %2488 = vmatpush.xpose.msra.mxu0 %v2428
        %2489 = vmatmul.f32.gmra.mxu0 %v1672
        %v2490 = vpop.f32.mrf.mxu0
        %v2491 = vadd.f32 %v2471, %v2490
        %2492 = vdwg.mxu0
        %v2493 = vmul.f32 %v2491, 0.00390625
        %vm2494 = vcmask 27648
        %2495 = vst.msk [vmem:[%s249] sm:$0xf] %vm2494, %v2493
        %s2496 = sand.u32 %s81, 1
        %s2497 = scalar_lea.sflag [#allocation6], %s2496
        %s2498 = sand.u32 %s81, 1
        %s2499 = smul.addr %s2498, 2
        %s2500 = scalar_lea.vmem [#allocation9], %s2499
        %s2501 = sand.u32 %s26, 1
        %s2502 = scalar_lea.sflag [#allocation11], %s2501
        %s2503 = sand.u32 %s107, 1
        %s2504 = smul.addr %s2503, 2
        %s2505 = scalar_lea.vmem [#allocation10], %s2504
        %s2506 = sand.u32 %s26, 1
        %s2507 = scalar_lea.sflag [#allocation11], %s2506
        %s2508 = sand.u32 %s133, 1
        %s2509 = smul.addr %s2508, 4
        %s2510 = scalar_lea.vmem [#allocation12], %s2509
        // Predicated region
        $region37: #{fused_forward.1} parent=27 // pred_check
          %p2511 = pneg %p91
        $region38: #{fused_forward.1} parent=27 // pred_check_branch
          %2513 = sbr.rel (%p2511) target = $region40
        $region39: #{fused_forward.1} parent=27 // pred_region
          %2515 = vsyncadd %s2497, 0
          %s2516 = smul.addr %s26, 2
          %s2517 = scalar_lea.hbm %s2, %s2516
          %s2519 = sshll.u32 %s2500, 4
          %s2520 = int_to_ptr.vmem [resolvable:$true] %s2519
          %s2521 = sshll.u32 %s2517, 4
          %s2522 = int_to_ptr.hbm [resolvable:$true] %s2521
          %2524 = dma.vmem_to_hbm [thread:$0]  %s2520, 32, %s2522, %s2497
        $region40: #{fused_forward.1} parent=27 // pred_fallthru
          _
        // Predicated region
        $region41: #{fused_forward.1} parent=27 // pred_check
          %p2525 = pneg %p117
        $region42: #{fused_forward.1} parent=27 // pred_check_branch
          %2527 = sbr.rel (%p2525) target = $region44
        $region43: #{fused_forward.1} parent=27 // pred_region
          %2529 = vsyncadd %s2502, 0
          %s2530 = smul.addr %s26, 2
          %s2531 = scalar_lea.hbm %s3, %s2530
          %s2533 = sshll.u32 %s2505, 4
          %s2534 = int_to_ptr.vmem [resolvable:$true] %s2533
          %s2535 = sshll.u32 %s2531, 4
          %s2536 = int_to_ptr.hbm [resolvable:$true] %s2535
          %2538 = dma.vmem_to_hbm [thread:$0]  %s2534, 32, %s2536, %s2502
        $region44: #{fused_forward.1} parent=27 // pred_fallthru
          _
        // Predicated region
        $region45: #{fused_forward.1} parent=27 // pred_check
          %p2539 = pneg %p143
        $region46: #{fused_forward.1} parent=27 // pred_check_branch
          %2541 = sbr.rel (%p2539) target = $region48
        $region47: #{fused_forward.1} parent=27 // pred_region
          %2543 = vsyncadd %s2507, 0
          %s2544 = smul.addr %s26, 4
          %s2545 = scalar_lea.hbm %s4, %s2544
          %s2547 = sshll.u32 %s2510, 4
          %s2548 = int_to_ptr.vmem [resolvable:$true] %s2547
          %s2549 = sshll.u32 %s2545, 4
          %s2550 = int_to_ptr.hbm [resolvable:$true] %s2549
          %2552 = dma.vmem_to_hbm [thread:$0]  %s2548, 64, %s2550, %s2507
        $region48: #{fused_forward.1} parent=27 // pred_fallthru
          _
      $region28: #{fused_forward.1} parent=5 // pred_fallthru
        _
      %p2553 = scmp.le.s32.totalorder 2, %s21
      // Predicated region
      $region49: #{fused_forward.1} parent=5 // pred_check
        %p2554 = pneg %p2553
      $region50: #{fused_forward.1} parent=5 // pred_check_branch
        %2556 = sbr.rel (%p2554) target = $region52
      $region51: #{fused_forward.1} parent=5 // pred_region
        %s2557 = ssub.s32 %s21, 2
        // Predicated region
        $region53: #{fused_forward.1} parent=51 // pred_check
          %p2558 = pneg %p97
        $region54: #{fused_forward.1} parent=51 // pred_check_branch
          %2560 = sbr.rel (%p2558) target = $region56
        $region55: #{fused_forward.1} parent=51 // pred_region
          %s2561 = sand.u32 %s82, 1
          %s2562 = scalar_lea.sflag [#allocation6], %s2561
          %s2563 = sand.u32 %s82, 1
          %s2564 = smul.addr %s2563, 2
          %s2565 = scalar_lea.vmem [#allocation9], %s2564
          %2567 = dma.done %s2562, 32
        $region56: #{fused_forward.1} parent=51 // pred_fallthru
          _
        // Predicated region
        $region57: #{fused_forward.1} parent=51 // pred_check
          %p2568 = pneg %p123
        $region58: #{fused_forward.1} parent=51 // pred_check_branch
          %2570 = sbr.rel (%p2568) target = $region60
        $region59: #{fused_forward.1} parent=51 // pred_region
          %s2571 = sand.u32 %s27, 1
          %s2572 = scalar_lea.sflag [#allocation11], %s2571
          %s2573 = sand.u32 %s108, 1
          %s2574 = smul.addr %s2573, 2
          %s2575 = scalar_lea.vmem [#allocation10], %s2574
          %2577 = dma.done %s2572, 32
        $region60: #{fused_forward.1} parent=51 // pred_fallthru
          _
        // Predicated region
        $region61: #{fused_forward.1} parent=51 // pred_check
          %p2578 = pneg %p149
        $region62: #{fused_forward.1} parent=51 // pred_check_branch
          %2580 = sbr.rel (%p2578) target = $region64
        $region63: #{fused_forward.1} parent=51 // pred_region
          %s2581 = sand.u32 %s27, 1
          %s2582 = scalar_lea.sflag [#allocation11], %s2581
          %s2583 = sand.u32 %s134, 1
          %s2584 = smul.addr %s2583, 4
          %s2585 = scalar_lea.vmem [#allocation12], %s2584
          %2587 = dma.done %s2582, 64
        $region64: #{fused_forward.1} parent=51 // pred_fallthru
          _
      $region52: #{fused_forward.1} parent=5 // pred_fallthru
        _
    $region6: #{fused_forward.1} parent=1 // loop_footer
      %s25 = sadd.s32 1, %s21
    $region7: #{fused_forward.1} parent=1 // loop_footer_branch
      %20 = sbr.rel target = $region3
    $region8: #{fused_forward.1} parent=1 // loop_exit
      _
    %2588 = vsyncpa [#allocation5], 1
    %s2589 = scalar_lea.sflag [#allocation5], 1
    %2590 = vsyncpa %s2589, 1
    %2591 = vsyncpa [#allocation6], 1
    %s2592 = scalar_lea.sflag [#allocation6], 1
    %2593 = vsyncpa %s2592, 1
    %2594 = vsyncpa [#allocation11], 1
    %s2595 = scalar_lea.sflag [#allocation11], 1
    %2596 = vsyncpa %s2595, 1
    %2597 = vsyncpa [#allocation7], 1
    %s2598 = scalar_lea.sflag [#allocation7], 1
    %2599 = vsyncpa %s2598, 1

</llo_original>
